<compile_context>
chip_gen: v7x
topology: tpu7x:2x2x1
jax: 0.10.0
libtpu: 0.0.40
codegen_flags: <defaults>
</compile_context>

<pallas_src>
import functools

import jax
import jax.numpy as jnp
from jax.experimental import pallas as pl
from jax.experimental.pallas import tpu as pltpu

LANE = 128        # vreg lane width / MXU-friendly feature width
SUBLANE = 8       # f32 sublane count
TILE_GRAPHS = 2   # graphs packed per grid step -> 2*64 = 128-row MXU tiles
                  # (set 4 -> 256-row tiles to fill v6e/v7x 256x256 MXUs)


def _round_up(x, m):
    return (x + m - 1) // m * m


def _pad2(a, rows, cols):
    return jnp.pad(a, ((0, rows - a.shape[0]), (0, cols - a.shape[1])))


# ------------------------------ fused kernel --------------------------------

def _fused_gnn_kernel(x_ref, a_ref, in_w_ref, in_b_ref, gcn_w_ref, gcn_b_ref,
                      head_w_ref, head_b_ref, o_ref, *, n_gcn):
    # Folded FeatureEncoder + pre_mp linear:
    #   h = ReLU(x @ (W_enc W_pre) + (b_enc W_pre + b_pre))
    h = jnp.dot(x_ref[...], in_w_ref[...],
                preferred_element_type=jnp.float32) + in_b_ref[...]
    h = jnp.maximum(h, 0.0)

    # GCNConvLayer x n_gcn:  h = h + ReLU(A_hat @ (h W) + b)   (eval mode)
    # TODO(synk): training-mode dropout (cfg.gnn.dropout > 0) not implemented.
    for l in range(n_gcn):
        xw = jnp.dot(h.astype(jnp.bfloat16), gcn_w_ref[l],
                     preferred_element_type=jnp.float32)
        # Re-read the block-diagonal A tile from VMEM every layer (not hoisted)
        # to avoid keeping 16+ extra vregs live across the unrolled loop.
        agg = jnp.dot(a_ref[...], xw.astype(jnp.bfloat16),
                      preferred_element_type=jnp.float32) + gcn_b_ref[l]
        h = h + jnp.maximum(agg, 0.0)

    # ComplexToReal: identity for real features.  Node-level head:
    out = jnp.dot(h.astype(jnp.bfloat16), head_w_ref[...],
                  preferred_element_type=jnp.float32) + head_b_ref[...]
    o_ref[...] = out.astype(o_ref.dtype)


def fused_forward(x_all, a_all, p, *, tile_n, f):
    """One pallas_call over all graph tiles; weights stay VMEM-resident."""
    num_tiles = x_all.shape[0] // tile_n
    n_gcn = p["gcn_w"].shape[0]

    operands = (x_all, a_all, p["in_w"], p["in_b"], p["gcn_w"], p["gcn_b"],
                p["head_w"], p["head_b"])

    flops = num_tiles * (2 * tile_n * f * f * (2 + n_gcn)      # in + xW + head
                         + 2 * tile_n * tile_n * f * n_gcn)    # A_hat @ (xW)
    bytes_accessed = (sum(int(o.size) * o.dtype.itemsize for o in operands)
                      + x_all.shape[0] * f * 4)

    grid_spec = pltpu.PrefetchScalarGridSpec(
        num_scalar_prefetch=0,
        grid=(num_tiles,),
        in_specs=[
            pl.BlockSpec((tile_n, f), lambda t: (t, 0)),          # x tile
            pl.BlockSpec((tile_n, tile_n), lambda t: (t, 0)),     # block-diag A
            # Weights/biases: constant block index -> single DMA, VMEM-resident.
            pl.BlockSpec(p["in_w"].shape, lambda t: (0, 0)),
            pl.BlockSpec(p["in_b"].shape, lambda t: (0, 0)),
            pl.BlockSpec(p["gcn_w"].shape, lambda t: (0, 0, 0)),
            pl.BlockSpec(p["gcn_b"].shape, lambda t: (0, 0, 0)),
            pl.BlockSpec(p["head_w"].shape, lambda t: (0, 0)),
            pl.BlockSpec(p["head_b"].shape, lambda t: (0, 0)),
        ],
        out_specs=pl.BlockSpec((tile_n, f), lambda t: (t, 0)),
    )

    return pl.pallas_call(
        functools.partial(_fused_gnn_kernel, n_gcn=n_gcn),
        out_shape=jax.ShapeDtypeStruct((x_all.shape[0], f), jnp.float32),
        grid_spec=grid_spec,
        compiler_params=pltpu.CompilerParams(
            dimension_semantics=("parallel",)),   # shards tiles over v7x's 2 TCs
        cost_estimate=pl.CostEstimate(flops=flops, transcendentals=0,
                                      bytes_accessed=bytes_accessed),
    )(*operands)


@functools.partial(jax.jit, static_argnames=("tile_n", "f"))
def custom_gnn_forward(padded_params, x_all, a_all, *, tile_n, f):
    return fused_forward(x_all, a_all, padded_params, tile_n=tile_n, f=f)


# ------------------------------- glue (JAX) ---------------------------------

def normalized_adjacency(edge_index, num_nodes):
    """A_hat = D^{-1/2} (A + I) D^{-1/2} as a dense float32 matrix.

    Note: duplicate edges collapse to weight 1 (.set); differs from a GCNConv
    that accumulates multi-edges, but matches the reference used below.
    """
    a = jnp.zeros((num_nodes, num_nodes), jnp.float32)
    a = a.at[edge_index[0], edge_index[1]].set(1.0)
    a = a + jnp.eye(num_nodes, dtype=jnp.float32)  # add self-loops
    deg = a.sum(axis=1)
    dinv = jax.lax.rsqrt(deg)
    return a * dinv[:, None] * dinv[None, :]


def glorot(key, shape):
    fan_in, fan_out = shape
    lim = (6.0 / (fan_in + fan_out)) ** 0.5
    return jax.random.uniform(key, shape, jnp.float32, -lim, lim)


def init_params(key, dim_in, dim_inner, dim_out,
                layers_pre_mp, layers_conv_setup, layers_mp):
    keys = iter(jax.random.split(key, 32))
    params = {
        "enc_w": glorot(next(keys), (dim_in, dim_inner)),
        "enc_b": jnp.zeros((dim_inner,), jnp.float32),
        "pre_mp": [],
        "gcn": [],
        "head_w": glorot(next(keys), (dim_inner, dim_out)),
        "head_b": jnp.zeros((dim_out,), jnp.float32),
    }
    for _ in range(layers_pre_mp):
        params["pre_mp"].append(
            (glorot(next(keys), (dim_inner, dim_inner)),
             jnp.zeros((dim_inner,), jnp.float32)))
    for _ in range(layers_conv_setup + layers_mp):
        params["gcn"].append(
            (glorot(next(keys), (dim_inner, dim_inner)),
             jnp.zeros((dim_inner,), jnp.float32)))
    return params


def prepare_params(params, f):
    """Fold encoder+pre_mp, zero-pad to f lanes, cast matmul weights to bf16.

    Zero padding is exact: padded weight rows/cols are zero, padded A_hat
    rows/cols are zero, so real-node / real-dim outputs are unchanged and the
    padded slab is sliced afterwards.  Padded node rows DO carry nonzero junk
    (0 @ W + b = b); they must never be read except through zero A columns.
    """
    assert len(params["pre_mp"]) == 1, "fold assumes layers_pre_mp == 1"
    pre_w, pre_b = params["pre_mp"][0]
    in_w = params["enc_w"] @ pre_w            # exact: no nonlinearity between
    in_b = params["enc_b"] @ pre_w + pre_b    # encoder and the pre_mp linear
    return {
        "in_w": _pad2(in_w, f, f).astype(jnp.bfloat16),
        "in_b": _pad2(in_b.reshape(1, -1), 1, f),                 # f32
        "gcn_w": jnp.stack([_pad2(w, f, f)
                            for w, _ in params["gcn"]]).astype(jnp.bfloat16),
        "gcn_b": jnp.stack([_pad2(b.reshape(1, -1), 1, f)
                            for _, b in params["gcn"]]),          # f32
        "head_w": _pad2(params["head_w"], f, f).astype(jnp.bfloat16),
        "head_b": _pad2(params["head_b"].reshape(1, -1), 1, f),   # f32
    }


def build_graph_batch(keys, n_nodes, dim_in, n_pad, f, tile_graphs):
    """Deterministic batch of graphs + packed/padded kernel operands."""
    xs, a_hats = [], []
    for g, key in enumerate(keys):
        x = jax.random.normal(key, (n_nodes, dim_in), jnp.float32)
        src = jnp.arange(n_nodes, dtype=jnp.int32)
        dst = (src + 1 + g) % n_nodes         # different ring stride per graph
        edge_index = jnp.stack([jnp.concatenate([src, dst]),
                                jnp.concatenate([dst, src])], axis=0)
        xs.append(x)
        a_hats.append(normalized_adjacency(edge_index, n_nodes))

    x_all = jnp.concatenate([_pad2(x, n_pad, f) for x in xs], axis=0)
    a_tiles = []
    for t in range(len(xs) // tile_graphs):
        blocks = [_pad2(a, n_pad, n_pad)
                  for a in a_hats[t * tile_graphs:(t + 1) * tile_graphs]]
        a_tiles.append(jax.scipy.linalg.block_diag(*blocks))
    a_all = jnp.concatenate(a_tiles, axis=0)
    return xs, a_hats, x_all.astype(jnp.bfloat16), a_all.astype(jnp.bfloat16)


def reference_forward(params, x, a_hat):
    """Pure-JAX f32 reference (same eval-mode semantics, unfolded params)."""
    h = x @ params["enc_w"] + params["enc_b"]
    for w, b in params["pre_mp"]:
        h = jnp.maximum(h @ w + b, 0.0)
    for w, b in params["gcn"]:
        h = h + jnp.maximum(a_hat @ (h @ w) + b, 0.0)
    return h @ params["head_w"] + params["head_b"]


# --------------------------------- main --------------------------------------

if __name__ == "__main__":
    N_NODES = 64
    DIM_IN, DIM_INNER, DIM_OUT = 16, 32, 4
    LAYERS_PRE_MP, LAYERS_CONV_SETUP, LAYERS_MP = 1, 1, 2
    NUM_GRAPHS = 4

    key = jax.random.PRNGKey(0)
    k_p, *k_graphs = jax.random.split(key, NUM_GRAPHS + 1)

    params = init_params(k_p, DIM_IN, DIM_INNER, DIM_OUT,
                         LAYERS_PRE_MP, LAYERS_CONV_SETUP, LAYERS_MP)

    # One-time layout prep (hoisted out of the forward path).
    F = _round_up(max(DIM_IN, DIM_INNER, DIM_OUT), LANE)     # -> 128 lanes
    N_PAD = _round_up(N_NODES, SUBLANE)                      # -> 64 rows/graph
    TILE_N = TILE_GRAPHS * N_PAD                             # -> 128-row tiles
    assert NUM_GRAPHS % TILE_GRAPHS == 0

    padded = prepare_params(params, F)
    xs, a_hats, x_all, a_all = build_graph_batch(
        k_graphs, N_NODES, DIM_IN, N_PAD, F, TILE_GRAPHS)

    out_all = custom_gnn_forward(padded, x_all, a_all, tile_n=TILE_N, f=F)
    jax.block_until_ready(out_all)

    # Slice real nodes / real output dims back out of the padded slab and
    # check each graph against the f32 reference (bf16 operands, f32 accum).
    for g in range(NUM_GRAPHS):
        out_g = out_all[g * N_PAD: g * N_PAD + N_NODES, :DIM_OUT]
        ref_g = reference_forward(params, xs[g], a_hats[g])
        assert out_g.shape == (N_NODES, DIM_OUT) and out_g.dtype == jnp.float32
        max_err = float(jnp.max(jnp.abs(out_g - ref_g)))
        assert jnp.allclose(out_g, ref_g, rtol=2e-2, atol=2e-2), (g, max_err)

    print("KERNEL_OK")
</pallas_src>

<mosaic_0001>
module attributes {stable_mosaic.version = 11 : i64} {
  func.func @_fused_gnn_kernel(%arg0: i32, %arg1: memref<128x128xbf16, #tpu.memory_space<vmem>>, %arg2: memref<128x128xbf16, #tpu.memory_space<vmem>>, %arg3: memref<128x128xbf16, #tpu.memory_space<vmem>>, %arg4: memref<1x128xf32, #tpu.memory_space<vmem>>, %arg5: memref<3x128x128xbf16, #tpu.memory_space<vmem>>, %arg6: memref<3x1x128xf32, #tpu.memory_space<vmem>>, %arg7: memref<128x128xbf16, #tpu.memory_space<vmem>>, %arg8: memref<1x128xf32, #tpu.memory_space<vmem>>, %arg9: memref<128x128xf32, #tpu.memory_space<vmem>>) attributes {dimension_semantics = [#tpu.dimension_semantics<parallel>], iteration_bounds = array<i64: 2>, scalar_prefetch = 0 : i64, scratch_operands = 0 : i64, tpu.core_type = #tpu.core_type<tc>, window_params = [{transform_indices = @transform_0, window_bounds = array<i64: 128, 128>}, {transform_indices = @transform_1, window_bounds = array<i64: 128, 128>}, {pipeline_mode = #tpu.pipeline_mode<synchronous>, transform_indices = @transform_2, window_bounds = array<i64: 128, 128>}, {pipeline_mode = #tpu.pipeline_mode<synchronous>, transform_indices = @transform_3, window_bounds = array<i64: 1, 128>}, {pipeline_mode = #tpu.pipeline_mode<synchronous>, transform_indices = @transform_4, window_bounds = array<i64: 3, 128, 128>}, {pipeline_mode = #tpu.pipeline_mode<synchronous>, transform_indices = @transform_5, window_bounds = array<i64: 3, 1, 128>}, {pipeline_mode = #tpu.pipeline_mode<synchronous>, transform_indices = @transform_6, window_bounds = array<i64: 128, 128>}, {pipeline_mode = #tpu.pipeline_mode<synchronous>, transform_indices = @transform_7, window_bounds = array<i64: 1, 128>}, {transform_indices = @transform_8, window_bounds = array<i64: 128, 128>}]} {
    %c0 = arith.constant 0 : index
    %c0_0 = arith.constant 0 : index
    %0 = vector.load %arg1[%c0, %c0_0] : memref<128x128xbf16, #tpu.memory_space<vmem>>, vector<128x128xbf16>
    %c0_1 = arith.constant 0 : index
    %c0_2 = arith.constant 0 : index
    %1 = vector.load %arg3[%c0_1, %c0_2] : memref<128x128xbf16, #tpu.memory_space<vmem>>, vector<128x128xbf16>
    %cst = arith.constant dense<0.000000e+00> : vector<128x128xf32>
    %2 = tpu.matmul %0, %1, %cst {dimension_numbers = #tpu.dot_dimension_numbers<[1], [0], [0], [1], [0, 0, 1, 1], [], []>} : vector<128x128xbf16>, vector<128x128xbf16>, vector<128x128xf32> -> vector<128x128xf32>
    %c0_3 = arith.constant 0 : index
    %c0_4 = arith.constant 0 : index
    %3 = vector.load %arg4[%c0_3, %c0_4] : memref<1x128xf32, #tpu.memory_space<vmem>>, vector<1x128xf32>
    %4 = vector.broadcast %3 : vector<1x128xf32> to vector<128x128xf32>
    %5 = arith.addf %2, %4 : vector<128x128xf32>
    %cst_5 = arith.constant 0.000000e+00 : f32
    %6 = vector.broadcast %cst_5 : f32 to vector<128x128xf32>
    %7 = arith.maximumf %5, %6 : vector<128x128xf32>
    %8 = arith.truncf %7 : vector<128x128xf32> to vector<128x128xbf16>
    %c0_6 = arith.constant 0 : index
    %c0_7 = arith.constant 0 : index
    %c0_8 = arith.constant 0 : index
    %9 = vector.load %arg5[%c0_6, %c0_7, %c0_8] : memref<3x128x128xbf16, #tpu.memory_space<vmem>>, vector<1x128x128xbf16>
    %10 = vector.shape_cast %9 : vector<1x128x128xbf16> to vector<128x128xbf16>
    %cst_9 = arith.constant dense<0.000000e+00> : vector<128x128xf32>
    %11 = tpu.matmul %8, %10, %cst_9 {dimension_numbers = #tpu.dot_dimension_numbers<[1], [0], [0], [1], [0, 0, 1, 1], [], []>} : vector<128x128xbf16>, vector<128x128xbf16>, vector<128x128xf32> -> vector<128x128xf32>
    %c0_10 = arith.constant 0 : index
    %c0_11 = arith.constant 0 : index
    %12 = vector.load %arg2[%c0_10, %c0_11] : memref<128x128xbf16, #tpu.memory_space<vmem>>, vector<128x128xbf16>
    %13 = arith.truncf %11 : vector<128x128xf32> to vector<128x128xbf16>
    %cst_12 = arith.constant dense<0.000000e+00> : vector<128x128xf32>
    %14 = tpu.matmul %12, %13, %cst_12 {dimension_numbers = #tpu.dot_dimension_numbers<[1], [0], [0], [1], [0, 0, 1, 1], [], []>} : vector<128x128xbf16>, vector<128x128xbf16>, vector<128x128xf32> -> vector<128x128xf32>
    %c0_13 = arith.constant 0 : index
    %c0_14 = arith.constant 0 : index
    %c0_15 = arith.constant 0 : index
    %15 = vector.load %arg6[%c0_13, %c0_14, %c0_15] : memref<3x1x128xf32, #tpu.memory_space<vmem>>, vector<1x1x128xf32>
    %16 = vector.shape_cast %15 : vector<1x1x128xf32> to vector<1x128xf32>
    %17 = vector.broadcast %16 : vector<1x128xf32> to vector<128x128xf32>
    %18 = arith.addf %14, %17 : vector<128x128xf32>
    %cst_16 = arith.constant 0.000000e+00 : f32
    %19 = vector.broadcast %cst_16 : f32 to vector<128x128xf32>
    %20 = arith.maximumf %18, %19 : vector<128x128xf32>
    %21 = arith.addf %7, %20 : vector<128x128xf32>
    %22 = arith.truncf %21 : vector<128x128xf32> to vector<128x128xbf16>
    %c1 = arith.constant 1 : index
    %c0_17 = arith.constant 0 : index
    %c0_18 = arith.constant 0 : index
    %23 = vector.load %arg5[%c1, %c0_17, %c0_18] : memref<3x128x128xbf16, #tpu.memory_space<vmem>>, vector<1x128x128xbf16>
    %24 = vector.shape_cast %23 : vector<1x128x128xbf16> to vector<128x128xbf16>
    %cst_19 = arith.constant dense<0.000000e+00> : vector<128x128xf32>
    %25 = tpu.matmul %22, %24, %cst_19 {dimension_numbers = #tpu.dot_dimension_numbers<[1], [0], [0], [1], [0, 0, 1, 1], [], []>} : vector<128x128xbf16>, vector<128x128xbf16>, vector<128x128xf32> -> vector<128x128xf32>
    %c0_20 = arith.constant 0 : index
    %c0_21 = arith.constant 0 : index
    %26 = vector.load %arg2[%c0_20, %c0_21] : memref<128x128xbf16, #tpu.memory_space<vmem>>, vector<128x128xbf16>
    %27 = arith.truncf %25 : vector<128x128xf32> to vector<128x128xbf16>
    %cst_22 = arith.constant dense<0.000000e+00> : vector<128x128xf32>
    %28 = tpu.matmul %26, %27, %cst_22 {dimension_numbers = #tpu.dot_dimension_numbers<[1], [0], [0], [1], [0, 0, 1, 1], [], []>} : vector<128x128xbf16>, vector<128x128xbf16>, vector<128x128xf32> -> vector<128x128xf32>
    %c1_23 = arith.constant 1 : index
    %c0_24 = arith.constant 0 : index
    %c0_25 = arith.constant 0 : index
    %29 = vector.load %arg6[%c1_23, %c0_24, %c0_25] : memref<3x1x128xf32, #tpu.memory_space<vmem>>, vector<1x1x128xf32>
    %30 = vector.shape_cast %29 : vector<1x1x128xf32> to vector<1x128xf32>
    %31 = vector.broadcast %30 : vector<1x128xf32> to vector<128x128xf32>
    %32 = arith.addf %28, %31 : vector<128x128xf32>
    %cst_26 = arith.constant 0.000000e+00 : f32
    %33 = vector.broadcast %cst_26 : f32 to vector<128x128xf32>
    %34 = arith.maximumf %32, %33 : vector<128x128xf32>
    %35 = arith.addf %21, %34 : vector<128x128xf32>
    %36 = arith.truncf %35 : vector<128x128xf32> to vector<128x128xbf16>
    %c2 = arith.constant 2 : index
    %c0_27 = arith.constant 0 : index
    %c0_28 = arith.constant 0 : index
    %37 = vector.load %arg5[%c2, %c0_27, %c0_28] : memref<3x128x128xbf16, #tpu.memory_space<vmem>>, vector<1x128x128xbf16>
    %38 = vector.shape_cast %37 : vector<1x128x128xbf16> to vector<128x128xbf16>
    %cst_29 = arith.constant dense<0.000000e+00> : vector<128x128xf32>
    %39 = tpu.matmul %36, %38, %cst_29 {dimension_numbers = #tpu.dot_dimension_numbers<[1], [0], [0], [1], [0, 0, 1, 1], [], []>} : vector<128x128xbf16>, vector<128x128xbf16>, vector<128x128xf32> -> vector<128x128xf32>
    %c0_30 = arith.constant 0 : index
    %c0_31 = arith.constant 0 : index
    %40 = vector.load %arg2[%c0_30, %c0_31] : memref<128x128xbf16, #tpu.memory_space<vmem>>, vector<128x128xbf16>
    %41 = arith.truncf %39 : vector<128x128xf32> to vector<128x128xbf16>
    %cst_32 = arith.constant dense<0.000000e+00> : vector<128x128xf32>
    %42 = tpu.matmul %40, %41, %cst_32 {dimension_numbers = #tpu.dot_dimension_numbers<[1], [0], [0], [1], [0, 0, 1, 1], [], []>} : vector<128x128xbf16>, vector<128x128xbf16>, vector<128x128xf32> -> vector<128x128xf32>
    %c2_33 = arith.constant 2 : index
    %c0_34 = arith.constant 0 : index
    %c0_35 = arith.constant 0 : index
    %43 = vector.load %arg6[%c2_33, %c0_34, %c0_35] : memref<3x1x128xf32, #tpu.memory_space<vmem>>, vector<1x1x128xf32>
    %44 = vector.shape_cast %43 : vector<1x1x128xf32> to vector<1x128xf32>
    %45 = vector.broadcast %44 : vector<1x128xf32> to vector<128x128xf32>
    %46 = arith.addf %42, %45 : vector<128x128xf32>
    %cst_36 = arith.constant 0.000000e+00 : f32
    %47 = vector.broadcast %cst_36 : f32 to vector<128x128xf32>
    %48 = arith.maximumf %46, %47 : vector<128x128xf32>
    %49 = arith.addf %35, %48 : vector<128x128xf32>
    %50 = arith.truncf %49 : vector<128x128xf32> to vector<128x128xbf16>
    %c0_37 = arith.constant 0 : index
    %c0_38 = arith.constant 0 : index
    %51 = vector.load %arg7[%c0_37, %c0_38] : memref<128x128xbf16, #tpu.memory_space<vmem>>, vector<128x128xbf16>
    %cst_39 = arith.constant dense<0.000000e+00> : vector<128x128xf32>
    %52 = tpu.matmul %50, %51, %cst_39 {dimension_numbers = #tpu.dot_dimension_numbers<[1], [0], [0], [1], [0, 0, 1, 1], [], []>} : vector<128x128xbf16>, vector<128x128xbf16>, vector<128x128xf32> -> vector<128x128xf32>
    %c0_40 = arith.constant 0 : index
    %c0_41 = arith.constant 0 : index
    %53 = vector.load %arg8[%c0_40, %c0_41] : memref<1x128xf32, #tpu.memory_space<vmem>>, vector<1x128xf32>
    %54 = vector.broadcast %53 : vector<1x128xf32> to vector<128x128xf32>
    %55 = arith.addf %52, %54 : vector<128x128xf32>
    %c0_42 = arith.constant 0 : index
    %c0_43 = arith.constant 0 : index
    %56 = vector.load %arg9[%c0_42, %c0_43] : memref<128x128xf32, #tpu.memory_space<vmem>>, vector<128x128xf32>
    tpu.vector_store %arg9[%c0_42, %c0_43], %55 {strides = array<i32>} : memref<128x128xf32, #tpu.memory_space<vmem>>, vector<128x128xf32>,
    return
  }
  func.func @transform_0(%arg0: i32) -> (i32, i32) {
    %c0_i32 = arith.constant 0 : i32
    %c0_i32_0 = arith.constant 0 : i32
    return %arg0, %c0_i32 : i32, i32
  }
  func.func @transform_1(%arg0: i32) -> (i32, i32) {
    %c0_i32 = arith.constant 0 : i32
    %c0_i32_0 = arith.constant 0 : i32
    return %arg0, %c0_i32 : i32, i32
  }
  func.func @transform_2(%arg0: i32) -> (i32, i32) {
    %c0_i32 = arith.constant 0 : i32
    %c0_i32_0 = arith.constant 0 : i32
    %c0_i32_1 = arith.constant 0 : i32
    return %c0_i32, %c0_i32_0 : i32, i32
  }
  func.func @transform_3(%arg0: i32) -> (i32, i32) {
    %c0_i32 = arith.constant 0 : i32
    %c0_i32_0 = arith.constant 0 : i32
    %c0_i32_1 = arith.constant 0 : i32
    return %c0_i32, %c0_i32_0 : i32, i32
  }
  func.func @transform_4(%arg0: i32) -> (i32, i32, i32) {
    %c0_i32 = arith.constant 0 : i32
    %c0_i32_0 = arith.constant 0 : i32
    %c0_i32_1 = arith.constant 0 : i32
    %c0_i32_2 = arith.constant 0 : i32
    return %c0_i32, %c0_i32_0, %c0_i32_1 : i32, i32, i32
  }
  func.func @transform_5(%arg0: i32) -> (i32, i32, i32) {
    %c0_i32 = arith.constant 0 : i32
    %c0_i32_0 = arith.constant 0 : i32
    %c0_i32_1 = arith.constant 0 : i32
    %c0_i32_2 = arith.constant 0 : i32
    return %c0_i32, %c0_i32_0, %c0_i32_1 : i32, i32, i32
  }
  func.func @transform_6(%arg0: i32) -> (i32, i32) {
    %c0_i32 = arith.constant 0 : i32
    %c0_i32_0 = arith.constant 0 : i32
    %c0_i32_1 = arith.constant 0 : i32
    return %c0_i32, %c0_i32_0 : i32, i32
  }
  func.func @transform_7(%arg0: i32) -> (i32, i32) {
    %c0_i32 = arith.constant 0 : i32
    %c0_i32_0 = arith.constant 0 : i32
    %c0_i32_1 = arith.constant 0 : i32
    return %c0_i32, %c0_i32_0 : i32, i32
  }
  func.func @transform_8(%arg0: i32) -> (i32, i32) {
    %c0_i32 = arith.constant 0 : i32
    %c0_i32_0 = arith.constant 0 : i32
    return %arg0, %c0_i32 : i32, i32
  }
}

</mosaic_0001>

<llo_original>
// kernel: custom_gnn_forward.1
$region0: #{custom_gnn_forward.1}
  #allocation0 [shape = 'u32[]', space=smem, size = 0x4, offset = 0x4, fixed_abs, tag = 'smem constant byte address 0x4 - core index']
  #allocation1 [shape = 'u32[144,128]{1,0:T(1,128)}', space=vmem, size = 0x12000, scoped, tag = 'internal scratch']
  %s0 = inlined_call_operand.hbm [shape: bf16[256,128], index: 0, kind: input, shape index: {}]
  %s1 = inlined_call_operand.hbm [shape: bf16[256,128], index: 1, kind: input, shape index: {}]
  %s2 = inlined_call_operand.hbm [shape: bf16[128,128], index: 2, kind: input, shape index: {}]
  %s3 = inlined_call_operand.vmem [shape: f32[1,128], index: 3, kind: input, shape index: {}]
  %s4 = inlined_call_operand.hbm [shape: bf16[3,128,128], index: 4, kind: input, shape index: {}]
  %s5 = inlined_call_operand.hbm [shape: f32[3,1,128], index: 5, kind: input, shape index: {}]
  %s6 = inlined_call_operand.hbm [shape: bf16[128,128], index: 6, kind: input, shape index: {}]
  %s7 = inlined_call_operand.vmem [shape: f32[1,128], index: 7, kind: input, shape index: {}]
  %s8 = inlined_call_operand.hbm [shape: f32[256,128], index: 8, kind: output, shape index: {}]
  %s9 = sld [smem:[#allocation0]]
  $region89: #{custom_gnn_forward.1} parent=0
    _
  %s11 = ssub.s32 1, %s9
  %s12 = scalar_select 0, %s11, %s9
  $region1: #{custom_gnn_forward.1} parent=0
    #allocation2 [shape = 'u8[65536]{0}', space=vmem, size = 0x10000, scoped, tag = 'input window, operand 0']
    #allocation3 [shape = 's32[2]{0}', space=sflag, size = 0x8, scoped, tag = 'scoped memory for custom_gnn_forward.1']
    #allocation4 [shape = 's32[2]{0}', space=sflag, size = 0x8, scoped, tag = 'scoped memory for custom_gnn_forward.1']
    #allocation5 [shape = 'u8[65536]{0}', space=vmem, size = 0x10000, scoped, tag = 'input window, operand 1']
    #allocation6 [shape = 's32[2]{0}', space=sflag, size = 0x8, scoped, tag = 'scoped memory for custom_gnn_forward.1']
    #allocation7 [shape = 'u8[32768]{0}', space=vmem, size = 0x8000, scoped, tag = 'input window, operand 2, single buffered']
    #allocation8 [shape = 'u8[98304]{0}', space=vmem, size = 0x18000, scoped, tag = 'input window, operand 4, single buffered']
    #allocation9 [shape = 's32[1]{0}', space=sflag, size = 0x4, scoped, tag = 'scoped memory for custom_gnn_forward.1']
    #allocation10 [shape = 'u8[1536]{0}', space=vmem, size = 0x800, scoped, tag = 'input window, operand 5, single buffered']
    #allocation11 [shape = 'u8[32768]{0}', space=vmem, size = 0x8000, scoped, tag = 'input window, operand 6, single buffered']
    #allocation12 [shape = 's32[1]{0}', space=sflag, size = 0x4, scoped, tag = 'scoped memory for custom_gnn_forward.1']
    #allocation13 [shape = 'u8[131072]{0}', space=vmem, size = 0x20000, scoped, tag = 'output window, operand 0']
    %13 = vsyncpa [#allocation3], 0
    %s14 = scalar_lea.sflag [#allocation3], 1
    %15 = vsyncpa %s14, 0
    %16 = vsyncpa [#allocation6], 0
    %s17 = scalar_lea.sflag [#allocation6], 1
    %18 = vsyncpa %s17, 0
    %19 = vsyncpa [#allocation9], 0
    %20 = vsyncpa [#allocation12], 0
    %21 = vsyncpa [#allocation4], 0
    %s22 = scalar_lea.sflag [#allocation4], 1
    %23 = vsyncpa %s22, 0
    loop: start=0, step=1, limit=4
    $region2: #{custom_gnn_forward.1} parent=1 // loop_pre_header
      _
    $region3: #{custom_gnn_forward.1} parent=1 // loop_header
      %s25 = sphi 0, %s29
      %p26 = scmp.ge.s32.totalorder %s25, 4
      %s35 = sphi 0, %s37
      %s38 = sphi 0, %s35
      %s39 = sphi 0, %s38
      %s55 = sphi 0, %s39
      %s61 = sphi 0, %s63
      %s64 = sphi 0, %s61
      %s65 = sphi 0, %s64
      %s81 = sphi 0, %s65
      %s85 = sphi 0, %s85
      %s87 = sphi 0, %s85
      %s88 = sphi 0, %s87
      %s102 = sphi 0, %s88
      %s106 = sphi 0, %s106
      %s108 = sphi 0, %s106
      %s109 = sphi 0, %s108
      %s123 = sphi 0, %s109
      %s127 = sphi 0, %s127
      %s129 = sphi 0, %s127
      %s130 = sphi 0, %s129
      %s144 = sphi 0, %s130
      %s148 = sphi 0, %s148
      %s150 = sphi 0, %s148
      %s151 = sphi 0, %s150
      %s165 = sphi 0, %s151
      %s169 = sphi 0, %s169
      %s171 = sphi 0, %s169
      %s172 = sphi 0, %s171
      %s186 = sphi 0, %s172
      %s190 = sphi 0, %s190
      %s192 = sphi 0, %s190
      %s193 = sphi 0, %s192
      %s207 = sphi 0, %s193
      %s213 = sphi 0, %s215
      %s216 = sphi 0, %s213
      %s217 = sphi 0, %s216
      %s233 = sphi 0, %s217
    $region4: #{custom_gnn_forward.1} parent=1 // loop_header_branch
      %28 = sbr.rel (%p26) target = $region8
    $region5: #{custom_gnn_forward.1} parent=1 // loop_body
      %s30 = ssub.s32 %s25, 1
      %s31 = ssub.s32 %s25, 2
      %s32 = sadd.s32 %s25, 1
      %s33 = ssub.s32 %s25, %s32
      %p34 = scmp.eq.s32.totalorder %s33, 0
      %s36 = sadd.s32 %s35, 1
      %s37 = scalar_select %p34, %s35, %s36
      %p40 = pneg %p34
      %p41 = scmp.eq.s32.totalorder %s25, 1
      %p42 = por %p40, %p41
      %p43 = scmp.ne.s32.totalorder %s35, %s38
      %p44 = scmp.eq.s32.totalorder %s25, 0
      %p45 = por %p43, %p44
      %p46 = scmp.ne.s32.totalorder %s35, %s38
      %p47 = scmp.eq.s32.totalorder %s30, 1
      %p48 = por %p46, %p47
      %p49 = scmp.ne.s32.totalorder %s38, %s39
      %p50 = scmp.eq.s32.totalorder %s30, 0
      %p51 = por %p49, %p50
      %p52 = scmp.ne.s32.totalorder %s38, %s39
      %p53 = scmp.eq.s32.totalorder %s31, 1
      %p54 = por %p52, %p53
      %p56 = scmp.ne.s32.totalorder %s39, %s55
      %p57 = scmp.eq.s32.totalorder %s31, 0
      %p58 = por %p56, %p57
      %s59 = ssub.s32 %s25, %s32
      %p60 = scmp.eq.s32.totalorder %s59, 0
      %s62 = sadd.s32 %s61, 1
      %s63 = scalar_select %p60, %s61, %s62
      %p66 = pneg %p60
      %p67 = scmp.eq.s32.totalorder %s25, 1
      %p68 = por %p66, %p67
      %p69 = scmp.ne.s32.totalorder %s61, %s64
      %p70 = scmp.eq.s32.totalorder %s25, 0
      %p71 = por %p69, %p70
      %p72 = scmp.ne.s32.totalorder %s61, %s64
      %p73 = scmp.eq.s32.totalorder %s30, 1
      %p74 = por %p72, %p73
      %p75 = scmp.ne.s32.totalorder %s64, %s65
      %p76 = scmp.eq.s32.totalorder %s30, 0
      %p77 = por %p75, %p76
      %p78 = scmp.ne.s32.totalorder %s64, %s65
      %p79 = scmp.eq.s32.totalorder %s31, 1
      %p80 = por %p78, %p79
      %p82 = scmp.ne.s32.totalorder %s65, %s81
      %p83 = scmp.eq.s32.totalorder %s31, 0
      %p84 = por %p82, %p83
      %s86 = sadd.s32 %s85, 1
      %p89 = scmp.eq.s32.totalorder %s25, 1
      %p90 = scmp.ne.s32.totalorder %s85, %s87
      %p91 = scmp.eq.s32.totalorder %s25, 0
      %p92 = por %p90, %p91
      %p93 = scmp.ne.s32.totalorder %s85, %s87
      %p94 = scmp.eq.s32.totalorder %s30, 1
      %p95 = por %p93, %p94
      %p96 = scmp.ne.s32.totalorder %s87, %s88
      %p97 = scmp.eq.s32.totalorder %s30, 0
      %p98 = por %p96, %p97
      %p99 = scmp.ne.s32.totalorder %s87, %s88
      %p100 = scmp.eq.s32.totalorder %s31, 1
      %p101 = por %p99, %p100
      %p103 = scmp.ne.s32.totalorder %s88, %s102
      %p104 = scmp.eq.s32.totalorder %s31, 0
      %p105 = por %p103, %p104
      %s107 = sadd.s32 %s106, 1
      %p110 = scmp.eq.s32.totalorder %s25, 1
      %p111 = scmp.ne.s32.totalorder %s106, %s108
      %p112 = scmp.eq.s32.totalorder %s25, 0
      %p113 = por %p111, %p112
      %p114 = scmp.ne.s32.totalorder %s106, %s108
      %p115 = scmp.eq.s32.totalorder %s30, 1
      %p116 = por %p114, %p115
      %p117 = scmp.ne.s32.totalorder %s108, %s109
      %p118 = scmp.eq.s32.totalorder %s30, 0
      %p119 = por %p117, %p118
      %p120 = scmp.ne.s32.totalorder %s108, %s109
      %p121 = scmp.eq.s32.totalorder %s31, 1
      %p122 = por %p120, %p121
      %p124 = scmp.ne.s32.totalorder %s109, %s123
      %p125 = scmp.eq.s32.totalorder %s31, 0
      %p126 = por %p124, %p125
      %s128 = sadd.s32 %s127, 1
      %p131 = scmp.eq.s32.totalorder %s25, 1
      %p132 = scmp.ne.s32.totalorder %s127, %s129
      %p133 = scmp.eq.s32.totalorder %s25, 0
      %p134 = por %p132, %p133
      %p135 = scmp.ne.s32.totalorder %s127, %s129
      %p136 = scmp.eq.s32.totalorder %s30, 1
      %p137 = por %p135, %p136
      %p138 = scmp.ne.s32.totalorder %s129, %s130
      %p139 = scmp.eq.s32.totalorder %s30, 0
      %p140 = por %p138, %p139
      %p141 = scmp.ne.s32.totalorder %s129, %s130
      %p142 = scmp.eq.s32.totalorder %s31, 1
      %p143 = por %p141, %p142
      %p145 = scmp.ne.s32.totalorder %s130, %s144
      %p146 = scmp.eq.s32.totalorder %s31, 0
      %p147 = por %p145, %p146
      %s149 = sadd.s32 %s148, 1
      %p152 = scmp.eq.s32.totalorder %s25, 1
      %p153 = scmp.ne.s32.totalorder %s148, %s150
      %p154 = scmp.eq.s32.totalorder %s25, 0
      %p155 = por %p153, %p154
      %p156 = scmp.ne.s32.totalorder %s148, %s150
      %p157 = scmp.eq.s32.totalorder %s30, 1
      %p158 = por %p156, %p157
      %p159 = scmp.ne.s32.totalorder %s150, %s151
      %p160 = scmp.eq.s32.totalorder %s30, 0
      %p161 = por %p159, %p160
      %p162 = scmp.ne.s32.totalorder %s150, %s151
      %p163 = scmp.eq.s32.totalorder %s31, 1
      %p164 = por %p162, %p163
      %p166 = scmp.ne.s32.totalorder %s151, %s165
      %p167 = scmp.eq.s32.totalorder %s31, 0
      %p168 = por %p166, %p167
      %s170 = sadd.s32 %s169, 1
      %p173 = scmp.eq.s32.totalorder %s25, 1
      %p174 = scmp.ne.s32.totalorder %s169, %s171
      %p175 = scmp.eq.s32.totalorder %s25, 0
      %p176 = por %p174, %p175
      %p177 = scmp.ne.s32.totalorder %s169, %s171
      %p178 = scmp.eq.s32.totalorder %s30, 1
      %p179 = por %p177, %p178
      %p180 = scmp.ne.s32.totalorder %s171, %s172
      %p181 = scmp.eq.s32.totalorder %s30, 0
      %p182 = por %p180, %p181
      %p183 = scmp.ne.s32.totalorder %s171, %s172
      %p184 = scmp.eq.s32.totalorder %s31, 1
      %p185 = por %p183, %p184
      %p187 = scmp.ne.s32.totalorder %s172, %s186
      %p188 = scmp.eq.s32.totalorder %s31, 0
      %p189 = por %p187, %p188
      %s191 = sadd.s32 %s190, 1
      %p194 = scmp.eq.s32.totalorder %s25, 1
      %p195 = scmp.ne.s32.totalorder %s190, %s192
      %p196 = scmp.eq.s32.totalorder %s25, 0
      %p197 = por %p195, %p196
      %p198 = scmp.ne.s32.totalorder %s190, %s192
      %p199 = scmp.eq.s32.totalorder %s30, 1
      %p200 = por %p198, %p199
      %p201 = scmp.ne.s32.totalorder %s192, %s193
      %p202 = scmp.eq.s32.totalorder %s30, 0
      %p203 = por %p201, %p202
      %p204 = scmp.ne.s32.totalorder %s192, %s193
      %p205 = scmp.eq.s32.totalorder %s31, 1
      %p206 = por %p204, %p205
      %p208 = scmp.ne.s32.totalorder %s193, %s207
      %p209 = scmp.eq.s32.totalorder %s31, 0
      %p210 = por %p208, %p209
      %s211 = ssub.s32 %s25, %s32
      %p212 = scmp.eq.s32.totalorder %s211, 0
      %s214 = sadd.s32 %s213, 1
      %s215 = scalar_select %p212, %s213, %s214
      %p218 = pneg %p212
      %p219 = scmp.eq.s32.totalorder %s25, 1
      %p220 = por %p218, %p219
      %p221 = scmp.ne.s32.totalorder %s213, %s216
      %p222 = scmp.eq.s32.totalorder %s25, 0
      %p223 = por %p221, %p222
      %p224 = scmp.ne.s32.totalorder %s213, %s216
      %p225 = scmp.eq.s32.totalorder %s30, 1
      %p226 = por %p224, %p225
      %p227 = scmp.ne.s32.totalorder %s216, %s217
      %p228 = scmp.eq.s32.totalorder %s30, 0
      %p229 = por %p227, %p228
      %p230 = scmp.ne.s32.totalorder %s216, %s217
      %p231 = scmp.eq.s32.totalorder %s31, 1
      %p232 = por %p230, %p231
      %p234 = scmp.ne.s32.totalorder %s217, %s233
      %p235 = scmp.eq.s32.totalorder %s31, 0
      %p236 = por %p234, %p235
      %p237 = scmp.le.s32.totalorder 1, %s25
      %p238 = scmp.lt.s32.totalorder %s25, 3
      %p239 = pnand %p237, %p238
      %p240 = pneg %p239
      // Predicated region
      $region9: #{custom_gnn_forward.1} parent=5 // pred_check
        _
      $region10: #{custom_gnn_forward.1} parent=5 // pred_check_branch
        %242 = sbr.rel (%p239) target = $region12
      $region11: #{custom_gnn_forward.1} parent=5 // pred_region
        %s243 = ssub.s32 %s25, 1
        // Predicated region
        $region13: #{custom_gnn_forward.1} parent=11 // pred_check
          %p244 = pneg %p98
        $region14: #{custom_gnn_forward.1} parent=11 // pred_check_branch
          %246 = sbr.rel (%p244) target = $region16
        $region15: #{custom_gnn_forward.1} parent=11 // pred_region
          %s248 = ssub.s32 1024, 1024
          %249 = vsyncadd [#allocation6], %s248
          %s250 = sshll.u32 [#allocation7], 4
          %s251 = int_to_ptr.vmem [resolvable:$true] %s250
          %256 = dma.hbm_to_vmem [thread:$0]  %s2, 1024, %s251, [#allocation6], 64, 64, 4
        $region16: #{custom_gnn_forward.1} parent=11 // pred_fallthru
          _
        // Predicated region
        $region17: #{custom_gnn_forward.1} parent=11 // pred_check
          %p257 = pneg %p119
        $region18: #{custom_gnn_forward.1} parent=11 // pred_check_branch
          %259 = sbr.rel (%p257) target = $region20
        $region19: #{custom_gnn_forward.1} parent=11 // pred_region
          _
        $region20: #{custom_gnn_forward.1} parent=11 // pred_fallthru
          _
        // Predicated region
        $region21: #{custom_gnn_forward.1} parent=11 // pred_check
          %p260 = pneg %p140
        $region22: #{custom_gnn_forward.1} parent=11 // pred_check_branch
          %262 = sbr.rel (%p260) target = $region24
        $region23: #{custom_gnn_forward.1} parent=11 // pred_region
          %s264 = ssub.s32 3072, 3072
          %265 = vsyncadd [#allocation9], %s264
          %s266 = sshll.u32 [#allocation8], 4
          %s267 = int_to_ptr.vmem [resolvable:$true] %s266
          %272 = dma.hbm_to_vmem [thread:$0]  %s4, 3072, %s267, [#allocation9], 64, 64, 4
        $region24: #{custom_gnn_forward.1} parent=11 // pred_fallthru
          _
        // Predicated region
        $region25: #{custom_gnn_forward.1} parent=11 // pred_check
          %p273 = pneg %p161
        $region26: #{custom_gnn_forward.1} parent=11 // pred_check_branch
          %275 = sbr.rel (%p273) target = $region28
        $region27: #{custom_gnn_forward.1} parent=11 // pred_region
          %s277 = ssub.s32 48, 48
          %278 = vsyncadd [#allocation9], %s277
          %s279 = sshll.u32 [#allocation10], 4
          %s280 = int_to_ptr.vmem [resolvable:$true] %s279
          %285 = dma.hbm_to_vmem [thread:$0]  %s5, 48, %s280, [#allocation9], 16, 16, 1
        $region28: #{custom_gnn_forward.1} parent=11 // pred_fallthru
          _
        // Predicated region
        $region29: #{custom_gnn_forward.1} parent=11 // pred_check
          %p286 = pneg %p182
        $region30: #{custom_gnn_forward.1} parent=11 // pred_check_branch
          %288 = sbr.rel (%p286) target = $region32
        $region31: #{custom_gnn_forward.1} parent=11 // pred_region
          %s290 = ssub.s32 1024, 1024
          %291 = vsyncadd [#allocation12], %s290
          %s292 = sshll.u32 [#allocation11], 4
          %s293 = int_to_ptr.vmem [resolvable:$true] %s292
          %298 = dma.hbm_to_vmem [thread:$0]  %s6, 1024, %s293, [#allocation12], 64, 64, 4
        $region32: #{custom_gnn_forward.1} parent=11 // pred_fallthru
          _
        // Predicated region
        $region33: #{custom_gnn_forward.1} parent=11 // pred_check
          %p299 = pneg %p203
        $region34: #{custom_gnn_forward.1} parent=11 // pred_check_branch
          %301 = sbr.rel (%p299) target = $region36
        $region35: #{custom_gnn_forward.1} parent=11 // pred_region
          _
        $region36: #{custom_gnn_forward.1} parent=11 // pred_fallthru
          _
      $region12: #{custom_gnn_forward.1} parent=5 // pred_fallthru
        _
      %p302 = scmp.lt.s32.totalorder %s25, 2
      // Predicated region
      $region37: #{custom_gnn_forward.1} parent=5 // pred_check
        %p303 = pneg %p302
      $region38: #{custom_gnn_forward.1} parent=5 // pred_check_branch
        %305 = sbr.rel (%p303) target = $region40
      $region39: #{custom_gnn_forward.1} parent=5 // pred_region
        // Predicated region
        $region41: #{custom_gnn_forward.1} parent=39 // pred_check
          %p306 = pneg %p45
        $region42: #{custom_gnn_forward.1} parent=39 // pred_check_branch
          %308 = sbr.rel (%p306) target = $region44
        $region43: #{custom_gnn_forward.1} parent=39 // pred_region
          %s309 = sand.u32 %s35, 1
          %s310 = scalar_lea.sflag [#allocation3], %s309
          %s311 = sand.u32 %s35, 1
          %s312 = smul.addr %s311, 64
          %s313 = scalar_lea.vmem [#allocation2], %s312
          %s314 = smul.u32 16, %s25
          %s316 = ssub.s32 1024, 1024
          %317 = vsyncadd %s310, %s316
          %s318 = smul.addr %s314, 64
          %s319 = scalar_lea.hbm %s0, %s318
          %s320 = sshll.u32 %s313, 4
          %s321 = int_to_ptr.vmem [resolvable:$true] %s320
          %326 = dma.hbm_to_vmem [thread:$0]  %s319, 1024, %s321, %s310, 64, 64, 4
        $region44: #{custom_gnn_forward.1} parent=39 // pred_fallthru
          _
        // Predicated region
        $region45: #{custom_gnn_forward.1} parent=39 // pred_check
          %p327 = pneg %p71
        $region46: #{custom_gnn_forward.1} parent=39 // pred_check_branch
          %329 = sbr.rel (%p327) target = $region48
        $region47: #{custom_gnn_forward.1} parent=39 // pred_region
          %s330 = sand.u32 %s25, 1
          %s331 = scalar_lea.sflag [#allocation6], %s330
          %s332 = sand.u32 %s61, 1
          %s333 = smul.addr %s332, 64
          %s334 = scalar_lea.vmem [#allocation5], %s333
          %s335 = smul.u32 16, %s25
          %s337 = ssub.s32 1024, 1024
          %338 = vsyncadd %s331, %s337
          %s339 = smul.addr %s335, 64
          %s340 = scalar_lea.hbm %s1, %s339
          %s341 = sshll.u32 %s334, 4
          %s342 = int_to_ptr.vmem [resolvable:$true] %s341
          %347 = dma.hbm_to_vmem [thread:$0]  %s340, 1024, %s342, %s331, 64, 64, 4
        $region48: #{custom_gnn_forward.1} parent=39 // pred_fallthru
          _
      $region40: #{custom_gnn_forward.1} parent=5 // pred_fallthru
        _
      %p348 = scmp.le.s32.totalorder 1, %s25
      %p349 = scmp.lt.s32.totalorder %s25, 3
      %p350 = pnand %p348, %p349
      %p351 = pneg %p350
      // Predicated region
      $region49: #{custom_gnn_forward.1} parent=5 // pred_check
        _
      $region50: #{custom_gnn_forward.1} parent=5 // pred_check_branch
        %353 = sbr.rel (%p350) target = $region52
      $region51: #{custom_gnn_forward.1} parent=5 // pred_region
        %s354 = ssub.s32 %s25, 1
        %s355 = sand.u32 %s38, 1
        %s356 = scalar_lea.sflag [#allocation3], %s355
        %s357 = sand.u32 %s38, 1
        %s358 = smul.addr %s357, 64
        %s359 = scalar_lea.vmem [#allocation2], %s358
        // Predicated region
        $region53: #{custom_gnn_forward.1} parent=51 // pred_check
          %p360 = pneg %p51
        $region54: #{custom_gnn_forward.1} parent=51 // pred_check_branch
          %362 = sbr.rel (%p360) target = $region56
        $region55: #{custom_gnn_forward.1} parent=51 // pred_region
          %363 = dma.done %s356, 1024
        $region56: #{custom_gnn_forward.1} parent=51 // pred_fallthru
          _
        %s364 = sand.u32 %s30, 1
        %s365 = scalar_lea.sflag [#allocation6], %s364
        %s366 = sand.u32 %s64, 1
        %s367 = smul.addr %s366, 64
        %s368 = scalar_lea.vmem [#allocation5], %s367
        // Predicated region
        $region57: #{custom_gnn_forward.1} parent=51 // pred_check
          %p369 = pneg %p77
        $region58: #{custom_gnn_forward.1} parent=51 // pred_check_branch
          %371 = sbr.rel (%p369) target = $region60
        $region59: #{custom_gnn_forward.1} parent=51 // pred_region
          %372 = dma.done %s365, 1024
        $region60: #{custom_gnn_forward.1} parent=51 // pred_fallthru
          _
        // Predicated region
        $region61: #{custom_gnn_forward.1} parent=51 // pred_check
          %p373 = pneg %p98
        $region62: #{custom_gnn_forward.1} parent=51 // pred_check_branch
          %375 = sbr.rel (%p373) target = $region64
        $region63: #{custom_gnn_forward.1} parent=51 // pred_region
          %376 = dma.done [#allocation6], 1024
        $region64: #{custom_gnn_forward.1} parent=51 // pred_fallthru
          _
        // Predicated region
        $region65: #{custom_gnn_forward.1} parent=51 // pred_check
          %p377 = pneg %p140
        $region66: #{custom_gnn_forward.1} parent=51 // pred_check_branch
          %379 = sbr.rel (%p377) target = $region68
        $region67: #{custom_gnn_forward.1} parent=51 // pred_region
          %380 = dma.done [#allocation9], 3072
        $region68: #{custom_gnn_forward.1} parent=51 // pred_fallthru
          _
        // Predicated region
        $region69: #{custom_gnn_forward.1} parent=51 // pred_check
          %p381 = pneg %p161
        $region70: #{custom_gnn_forward.1} parent=51 // pred_check_branch
          %383 = sbr.rel (%p381) target = $region72
        $region71: #{custom_gnn_forward.1} parent=51 // pred_region
          %384 = dma.done [#allocation9], 48
        $region72: #{custom_gnn_forward.1} parent=51 // pred_fallthru
          _
        // Predicated region
        $region73: #{custom_gnn_forward.1} parent=51 // pred_check
          %p385 = pneg %p182
        $region74: #{custom_gnn_forward.1} parent=51 // pred_check_branch
          %387 = sbr.rel (%p385) target = $region76
        $region75: #{custom_gnn_forward.1} parent=51 // pred_region
          %388 = dma.done [#allocation12], 1024
        $region76: #{custom_gnn_forward.1} parent=51 // pred_fallthru
          _
        %s389 = sand.u32 %s38, 1
        %s390 = scalar_lea.sflag [#allocation3], %s389
        %s391 = sand.u32 %s38, 1
        %s392 = smul.addr %s391, 64
        %s393 = scalar_lea.vmem [#allocation2], %s392
        %p394 = pneg %p51
        %p395 = pneg %p48
        %s396 = sand.u32 %s30, 1
        %s397 = scalar_lea.sflag [#allocation6], %s396
        %s398 = sand.u32 %s64, 1
        %s399 = smul.addr %s398, 64
        %s400 = scalar_lea.vmem [#allocation5], %s399
        %p401 = pneg %p77
        %p402 = pneg %p74
        %p403 = pneg %p98
        %p404 = pneg %p95
        %p405 = pneg %p119
        %p406 = pneg %p116
        %p407 = pneg %p140
        %p408 = pneg %p137
        %p409 = pneg %p161
        %p410 = pneg %p158
        %p411 = pneg %p182
        %p412 = pneg %p179
        %p413 = pneg %p203
        %p414 = pneg %p200
        %p415 = pneg %p229
        %p416 = pneg %p226
        %s417 = sand.u32 %s216, 1
        %s418 = scalar_lea.sflag [#allocation4], %s417
        %s419 = sand.u32 %s216, 1
        %s420 = smul.addr %s419, 128
        %s421 = scalar_lea.vmem [#allocation13], %s420
        %s422 = smul.u32 16, %s30
        %s423 = smul.u32 16, %s30
        %s424 = smul.u32 16, %s30
        %v426 = vld [vmem:[%s359] sm:$0xf]
        %v427 = vld [vmem:[%s359 + $0x4] sm:$0xf]
        %v428 = vld [vmem:[%s359 + $0x8] sm:$0xf]
        %v429 = vld [vmem:[%s359 + $0xc] sm:$0xf]
        %v430 = vld [vmem:[%s359 + $0x10] sm:$0xf]
        %v431 = vld [vmem:[%s359 + $0x14] sm:$0xf]
        %v432 = vld [vmem:[%s359 + $0x18] sm:$0xf]
        %v433 = vld [vmem:[%s359 + $0x1c] sm:$0xf]
        %v434 = vld [vmem:[%s359 + $0x20] sm:$0xf]
        %v435 = vld [vmem:[%s359 + $0x24] sm:$0xf]
        %v436 = vld [vmem:[%s359 + $0x28] sm:$0xf]
        %v437 = vld [vmem:[%s359 + $0x2c] sm:$0xf]
        %v438 = vld [vmem:[%s359 + $0x30] sm:$0xf]
        %v439 = vld [vmem:[%s359 + $0x34] sm:$0xf]
        %v440 = vld [vmem:[%s359 + $0x38] sm:$0xf]
        %v441 = vld [vmem:[%s359 + $0x3c] sm:$0xf]
        %v442 = vld [vmem:[#allocation7] sm:$0xf]
        %v443 = vld [vmem:[#allocation7 + $0x4] sm:$0xf]
        %v444 = vld [vmem:[#allocation7 + $0x8] sm:$0xf]
        %v445 = vld [vmem:[#allocation7 + $0xc] sm:$0xf]
        %v446 = vld [vmem:[#allocation7 + $0x10] sm:$0xf]
        %v447 = vld [vmem:[#allocation7 + $0x14] sm:$0xf]
        %v448 = vld [vmem:[#allocation7 + $0x18] sm:$0xf]
        %v449 = vld [vmem:[#allocation7 + $0x1c] sm:$0xf]
        %v450 = vld [vmem:[#allocation7 + $0x20] sm:$0xf]
        %v451 = vld [vmem:[#allocation7 + $0x24] sm:$0xf]
        %v452 = vld [vmem:[#allocation7 + $0x28] sm:$0xf]
        %v453 = vld [vmem:[#allocation7 + $0x2c] sm:$0xf]
        %v454 = vld [vmem:[#allocation7 + $0x30] sm:$0xf]
        %v455 = vld [vmem:[#allocation7 + $0x34] sm:$0xf]
        %v456 = vld [vmem:[#allocation7 + $0x38] sm:$0xf]
        %v457 = vld [vmem:[#allocation7 + $0x3c] sm:$0xf]
        %v458 = vld [vmem:[%s3] sm:$0x1]
        %v460 = vlaneseq
        %v461 = vshrl.u32 %v460, 7
        %v462 = vsub.s32 0, %v461
        %v463 = vrot.slane %v458, %v462
        %v481 = vunpack.c.l.b16 %v426
        %v482 = vunpack.c.l.b16 %v427
        %v483 = vunpack.c.l.b16 %v428
        %v484 = vunpack.c.l.b16 %v429
        %v485 = vunpack.c.l.b16 %v430
        %v486 = vunpack.c.l.b16 %v431
        %v487 = vunpack.c.l.b16 %v432
        %v488 = vunpack.c.l.b16 %v433
        %v489 = vunpack.c.l.b16 %v434
        %v490 = vunpack.c.l.b16 %v435
        %v491 = vunpack.c.l.b16 %v436
        %v492 = vunpack.c.l.b16 %v437
        %v493 = vunpack.c.l.b16 %v438
        %v494 = vunpack.c.l.b16 %v439
        %v495 = vunpack.c.l.b16 %v440
        %v496 = vunpack.c.l.b16 %v441
        %v497 = vpack.c.b16 %v482, %v481
        %v498 = vpack.c.b16 %v484, %v483
        %v499 = vpack.c.b16 %v486, %v485
        %v500 = vpack.c.b16 %v488, %v487
        %v501 = vpack.c.b16 %v490, %v489
        %v502 = vpack.c.b16 %v492, %v491
        %v503 = vpack.c.b16 %v494, %v493
        %v504 = vpack.c.b16 %v496, %v495
        %v529 = vunpack.c.l.b16 %v442
        %v530 = vunpack.c.l.b16 %v443
        %v531 = vunpack.c.l.b16 %v444
        %v532 = vunpack.c.l.b16 %v445
        %v533 = vunpack.c.l.b16 %v446
        %v534 = vunpack.c.l.b16 %v447
        %v535 = vunpack.c.l.b16 %v448
        %v536 = vunpack.c.l.b16 %v449
        %v537 = vunpack.c.l.b16 %v450
        %v538 = vunpack.c.l.b16 %v451
        %v539 = vunpack.c.l.b16 %v452
        %v540 = vunpack.c.l.b16 %v453
        %v541 = vunpack.c.l.b16 %v454
        %v542 = vunpack.c.l.b16 %v455
        %v543 = vunpack.c.l.b16 %v456
        %v544 = vunpack.c.l.b16 %v457
        %v545 = vpack.c.b16 %v530, %v529
        %v546 = vpack.c.b16 %v532, %v531
        %v547 = vpack.c.b16 %v534, %v533
        %v548 = vpack.c.b16 %v536, %v535
        %v549 = vpack.c.b16 %v538, %v537
        %v550 = vpack.c.b16 %v540, %v539
        %v551 = vpack.c.b16 %v542, %v541
        %v552 = vpack.c.b16 %v544, %v543
        %561 = vmatprep.subr.bf16.mxu0 0
        %562 = vmatpush1.bf16.msra.mxu0 %v545
        %563 = vmatprep.subr.bf16.mxu0 0
        %564 = vmatpush1.bf16.msra.mxu0 %v546
        %565 = vmatprep.subr.bf16.mxu0 0
        %566 = vmatpush1.bf16.msra.mxu0 %v547
        %567 = vmatprep.subr.bf16.mxu0 0
        %568 = vmatpush1.bf16.msra.mxu0 %v548
        %569 = vmatprep.subr.bf16.mxu0 0
        %570 = vmatpush1.bf16.msra.mxu0 %v549
        %571 = vmatprep.subr.bf16.mxu0 0
        %572 = vmatpush1.bf16.msra.mxu0 %v550
        %573 = vmatprep.subr.bf16.mxu0 0
        %574 = vmatpush1.bf16.msra.mxu0 %v551
        %575 = vmatprep.subr.bf16.mxu0 0
        %576 = vmatpush1.bf16.msra.mxu0 %v552
        %577 = vmatprep.subr.bf16.mxu0 0
        %578 = vmatpush1.bf16.msra.mxu0 0
        %579 = vmatprep.subr.bf16.mxu0 0
        %580 = vmatpush1.bf16.msra.mxu0 0
        %581 = vmatprep.subr.bf16.mxu0 0
        %582 = vmatpush1.bf16.msra.mxu0 0
        %583 = vmatprep.subr.bf16.mxu0 0
        %584 = vmatpush1.bf16.msra.mxu0 0
        %585 = vmatprep.subr.bf16.mxu0 0
        %586 = vmatpush1.bf16.msra.mxu0 0
        %587 = vmatprep.subr.bf16.mxu0 0
        %588 = vmatpush1.bf16.msra.mxu0 0
        %589 = vmatprep.subr.bf16.mxu0 0
        %590 = vmatpush1.bf16.msra.mxu0 0
        %591 = vmatprep.subr.bf16.mxu0 0
        %592 = vmatpush1.bf16.msra.mxu0 0
        %593 = vmatprep.mubr.bf16.mxu0 0
        %594 = vmatmul.mubr.bf16.gmra.mrb[0].mxu0 %v497
        %v595 = vpop.f32.mrb[0].mxu0
        %v596 = vadd.f32 %v463, %v595
        %v597 = vpop.f32.mrb[0].mxu0
        %v598 = vpop.f32.mrb[0].mxu0
        %v599 = vadd.f32 %v463, %v598
        %v600 = vpop.f32.mrb[0].mxu0
        %601 = vmatprep.mubr.bf16.mxu0 0
        %602 = vmatmul.mubr.bf16.gmra.mrb[0].mxu0 %v498
        %v603 = vpop.f32.mrb[0].mxu0
        %v604 = vadd.f32 %v463, %v603
        %v605 = vpop.f32.mrb[0].mxu0
        %v606 = vpop.f32.mrb[0].mxu0
        %v607 = vadd.f32 %v463, %v606
        %v608 = vpop.f32.mrb[0].mxu0
        %609 = vmatprep.mubr.bf16.mxu0 0
        %610 = vmatmul.mubr.bf16.gmra.mrb[0].mxu0 %v499
        %v611 = vpop.f32.mrb[0].mxu0
        %v612 = vadd.f32 %v463, %v611
        %v613 = vpop.f32.mrb[0].mxu0
        %v614 = vpop.f32.mrb[0].mxu0
        %v615 = vadd.f32 %v463, %v614
        %v616 = vpop.f32.mrb[0].mxu0
        %617 = vmatprep.mubr.bf16.mxu0 0
        %618 = vmatmul.mubr.bf16.gmra.mrb[0].mxu0 %v500
        %v619 = vpop.f32.mrb[0].mxu0
        %v620 = vadd.f32 %v463, %v619
        %v621 = vpop.f32.mrb[0].mxu0
        %v622 = vpop.f32.mrb[0].mxu0
        %v623 = vadd.f32 %v463, %v622
        %v624 = vpop.f32.mrb[0].mxu0
        %625 = vmatprep.mubr.bf16.mxu0 0
        %626 = vmatmul.mubr.bf16.gmra.mrb[0].mxu0 %v501
        %v627 = vpop.f32.mrb[0].mxu0
        %v628 = vadd.f32 %v463, %v627
        %v629 = vpop.f32.mrb[0].mxu0
        %v630 = vpop.f32.mrb[0].mxu0
        %v631 = vadd.f32 %v463, %v630
        %v632 = vpop.f32.mrb[0].mxu0
        %633 = vmatprep.mubr.bf16.mxu0 0
        %634 = vmatmul.mubr.bf16.gmra.mrb[0].mxu0 %v502
        %v635 = vpop.f32.mrb[0].mxu0
        %v636 = vadd.f32 %v463, %v635
        %v637 = vpop.f32.mrb[0].mxu0
        %v638 = vpop.f32.mrb[0].mxu0
        %v639 = vadd.f32 %v463, %v638
        %v640 = vpop.f32.mrb[0].mxu0
        %641 = vmatprep.mubr.bf16.mxu0 0
        %642 = vmatmul.mubr.bf16.gmra.mrb[0].mxu0 %v503
        %v643 = vpop.f32.mrb[0].mxu0
        %v644 = vadd.f32 %v463, %v643
        %v645 = vpop.f32.mrb[0].mxu0
        %v646 = vpop.f32.mrb[0].mxu0
        %v647 = vadd.f32 %v463, %v646
        %v648 = vpop.f32.mrb[0].mxu0
        %649 = vmatprep.mubr.bf16.mxu0 0
        %650 = vmatmul.mubr.bf16.gmra.mrb[0].mxu0 %v504
        %v651 = vpop.f32.mrb[0].mxu0
        %v652 = vadd.f32 %v463, %v651
        %v653 = vpop.f32.mrb[0].mxu0
        %v654 = vpop.f32.mrb[0].mxu0
        %v655 = vadd.f32 %v463, %v654
        %v656 = vpop.f32.mrb[0].mxu0
        %657 = vdwg.mxu0
        %v658 = vmax.f32 %v596, 0.0
        %v659 = vmax.f32 %v599, 0.0
        %v660 = vmax.f32 %v604, 0.0
        %v661 = vmax.f32 %v607, 0.0
        %v662 = vmax.f32 %v612, 0.0
        %v663 = vmax.f32 %v615, 0.0
        %v664 = vmax.f32 %v620, 0.0
        %v665 = vmax.f32 %v623, 0.0
        %v666 = vmax.f32 %v628, 0.0
        %v667 = vmax.f32 %v631, 0.0
        %v668 = vmax.f32 %v636, 0.0
        %v669 = vmax.f32 %v639, 0.0
        %v670 = vmax.f32 %v644, 0.0
        %v671 = vmax.f32 %v647, 0.0
        %v672 = vmax.f32 %v652, 0.0
        %v673 = vmax.f32 %v655, 0.0
        %v674 = vpack.c.bf16 %v659, %v658
        %v675 = vpack.c.bf16 %v661, %v660
        %v676 = vpack.c.bf16 %v663, %v662
        %v677 = vpack.c.bf16 %v665, %v664
        %v678 = vpack.c.bf16 %v667, %v666
        %v679 = vpack.c.bf16 %v669, %v668
        %v680 = vpack.c.bf16 %v671, %v670
        %v681 = vpack.c.bf16 %v673, %v672
        %v682 = vld [vmem:[#allocation8] sm:$0xf]
        %v683 = vld [vmem:[#allocation8 + $0x4] sm:$0xf]
        %v684 = vld [vmem:[#allocation8 + $0x8] sm:$0xf]
        %v685 = vld [vmem:[#allocation8 + $0xc] sm:$0xf]
        %v686 = vld [vmem:[#allocation8 + $0x10] sm:$0xf]
        %v687 = vld [vmem:[#allocation8 + $0x14] sm:$0xf]
        %v688 = vld [vmem:[#allocation8 + $0x18] sm:$0xf]
        %v689 = vld [vmem:[#allocation8 + $0x1c] sm:$0xf]
        %v690 = vld [vmem:[#allocation8 + $0x20] sm:$0xf]
        %v691 = vld [vmem:[#allocation8 + $0x24] sm:$0xf]
        %v692 = vld [vmem:[#allocation8 + $0x28] sm:$0xf]
        %v693 = vld [vmem:[#allocation8 + $0x2c] sm:$0xf]
        %v694 = vld [vmem:[#allocation8 + $0x30] sm:$0xf]
        %v695 = vld [vmem:[#allocation8 + $0x34] sm:$0xf]
        %v696 = vld [vmem:[#allocation8 + $0x38] sm:$0xf]
        %v697 = vld [vmem:[#allocation8 + $0x3c] sm:$0xf]
        %v714 = vunpack.c.l.b16 %v682
        %v715 = vunpack.c.l.b16 %v683
        %v716 = vunpack.c.l.b16 %v684
        %v717 = vunpack.c.l.b16 %v685
        %v718 = vunpack.c.l.b16 %v686
        %v719 = vunpack.c.l.b16 %v687
        %v720 = vunpack.c.l.b16 %v688
        %v721 = vunpack.c.l.b16 %v689
        %v722 = vunpack.c.l.b16 %v690
        %v723 = vunpack.c.l.b16 %v691
        %v724 = vunpack.c.l.b16 %v692
        %v725 = vunpack.c.l.b16 %v693
        %v726 = vunpack.c.l.b16 %v694
        %v727 = vunpack.c.l.b16 %v695
        %v728 = vunpack.c.l.b16 %v696
        %v729 = vunpack.c.l.b16 %v697
        %v730 = vpack.c.b16 %v715, %v714
        %v731 = vpack.c.b16 %v717, %v716
        %v732 = vpack.c.b16 %v719, %v718
        %v733 = vpack.c.b16 %v721, %v720
        %v734 = vpack.c.b16 %v723, %v722
        %v735 = vpack.c.b16 %v725, %v724
        %v736 = vpack.c.b16 %v727, %v726
        %v737 = vpack.c.b16 %v729, %v728
        %746 = vmatprep.subr.bf16.mxu0 0
        %747 = vmatpush1.bf16.msra.mxu0 %v730
        %748 = vmatprep.subr.bf16.mxu0 0
        %749 = vmatpush1.bf16.msra.mxu0 %v731
        %750 = vmatprep.subr.bf16.mxu0 0
        %751 = vmatpush1.bf16.msra.mxu0 %v732
        %752 = vmatprep.subr.bf16.mxu0 0
        %753 = vmatpush1.bf16.msra.mxu0 %v733
        %754 = vmatprep.subr.bf16.mxu0 0
        %755 = vmatpush1.bf16.msra.mxu0 %v734
        %756 = vmatprep.subr.bf16.mxu0 0
        %757 = vmatpush1.bf16.msra.mxu0 %v735
        %758 = vmatprep.subr.bf16.mxu0 0
        %759 = vmatpush1.bf16.msra.mxu0 %v736
        %760 = vmatprep.subr.bf16.mxu0 0
        %761 = vmatpush1.bf16.msra.mxu0 %v737
        %762 = vmatprep.subr.bf16.mxu0 0
        %763 = vmatpush1.bf16.msra.mxu0 0
        %764 = vmatprep.subr.bf16.mxu0 0
        %765 = vmatpush1.bf16.msra.mxu0 0
        %766 = vmatprep.subr.bf16.mxu0 0
        %767 = vmatpush1.bf16.msra.mxu0 0
        %768 = vmatprep.subr.bf16.mxu0 0
        %769 = vmatpush1.bf16.msra.mxu0 0
        %770 = vmatprep.subr.bf16.mxu0 0
        %771 = vmatpush1.bf16.msra.mxu0 0
        %772 = vmatprep.subr.bf16.mxu0 0
        %773 = vmatpush1.bf16.msra.mxu0 0
        %774 = vmatprep.subr.bf16.mxu0 0
        %775 = vmatpush1.bf16.msra.mxu0 0
        %776 = vmatprep.subr.bf16.mxu0 0
        %777 = vmatpush1.bf16.msra.mxu0 0
        %778 = vmatprep.mubr.bf16.mxu0 0
        %779 = vmatmul.mubr.bf16.gmra.mrb[0].mxu0 %v674
        %v780 = vpop.f32.mrb[0].mxu0
        %v781 = vadd.f32 0.0, %v780
        %v782 = vpop.f32.mrb[0].mxu0
        %v783 = vpop.f32.mrb[0].mxu0
        %v784 = vadd.f32 0.0, %v783
        %v785 = vpop.f32.mrb[0].mxu0
        %786 = vmatprep.mubr.bf16.mxu0 0
        %787 = vmatmul.mubr.bf16.gmra.mrb[0].mxu0 %v675
        %v788 = vpop.f32.mrb[0].mxu0
        %v789 = vadd.f32 0.0, %v788
        %v790 = vpop.f32.mrb[0].mxu0
        %v791 = vpop.f32.mrb[0].mxu0
        %v792 = vadd.f32 0.0, %v791
        %v793 = vpop.f32.mrb[0].mxu0
        %794 = vmatprep.mubr.bf16.mxu0 0
        %795 = vmatmul.mubr.bf16.gmra.mrb[0].mxu0 %v676
        %v796 = vpop.f32.mrb[0].mxu0
        %v797 = vadd.f32 0.0, %v796
        %v798 = vpop.f32.mrb[0].mxu0
        %v799 = vpop.f32.mrb[0].mxu0
        %v800 = vadd.f32 0.0, %v799
        %v801 = vpop.f32.mrb[0].mxu0
        %802 = vmatprep.mubr.bf16.mxu0 0
        %803 = vmatmul.mubr.bf16.gmra.mrb[0].mxu0 %v677
        %v804 = vpop.f32.mrb[0].mxu0
        %v805 = vadd.f32 0.0, %v804
        %v806 = vpop.f32.mrb[0].mxu0
        %v807 = vpop.f32.mrb[0].mxu0
        %v808 = vadd.f32 0.0, %v807
        %v809 = vpop.f32.mrb[0].mxu0
        %810 = vmatprep.mubr.bf16.mxu0 0
        %811 = vmatmul.mubr.bf16.gmra.mrb[0].mxu0 %v678
        %v812 = vpop.f32.mrb[0].mxu0
        %v813 = vadd.f32 0.0, %v812
        %v814 = vpop.f32.mrb[0].mxu0
        %v815 = vpop.f32.mrb[0].mxu0
        %v816 = vadd.f32 0.0, %v815
        %v817 = vpop.f32.mrb[0].mxu0
        %818 = vmatprep.mubr.bf16.mxu0 0
        %819 = vmatmul.mubr.bf16.gmra.mrb[0].mxu0 %v679
        %v820 = vpop.f32.mrb[0].mxu0
        %v821 = vadd.f32 0.0, %v820
        %v822 = vpop.f32.mrb[0].mxu0
        %v823 = vpop.f32.mrb[0].mxu0
        %v824 = vadd.f32 0.0, %v823
        %v825 = vpop.f32.mrb[0].mxu0
        %826 = vmatprep.mubr.bf16.mxu0 0
        %827 = vmatmul.mubr.bf16.gmra.mrb[0].mxu0 %v680
        %v828 = vpop.f32.mrb[0].mxu0
        %v829 = vadd.f32 0.0, %v828
        %v830 = vpop.f32.mrb[0].mxu0
        %v831 = vpop.f32.mrb[0].mxu0
        %v832 = vadd.f32 0.0, %v831
        %v833 = vpop.f32.mrb[0].mxu0
        %834 = vmatprep.mubr.bf16.mxu0 0
        %835 = vmatmul.mubr.bf16.gmra.mrb[0].mxu0 %v681
        %v836 = vpop.f32.mrb[0].mxu0
        %v837 = vadd.f32 0.0, %v836
        %v838 = vpop.f32.mrb[0].mxu0
        %v839 = vpop.f32.mrb[0].mxu0
        %v840 = vadd.f32 0.0, %v839
        %v841 = vpop.f32.mrb[0].mxu0
        %842 = vdwg.mxu0
        %v843 = vld [vmem:[%s368] sm:$0xf]
        %v844 = vld [vmem:[%s368 + $0x4] sm:$0xf]
        %v845 = vld [vmem:[%s368 + $0x8] sm:$0xf]
        %v846 = vld [vmem:[%s368 + $0xc] sm:$0xf]
        %v847 = vld [vmem:[%s368 + $0x10] sm:$0xf]
        %v848 = vld [vmem:[%s368 + $0x14] sm:$0xf]
        %v849 = vld [vmem:[%s368 + $0x18] sm:$0xf]
        %v850 = vld [vmem:[%s368 + $0x1c] sm:$0xf]
        %v851 = vld [vmem:[%s368 + $0x20] sm:$0xf]
        %v852 = vld [vmem:[%s368 + $0x24] sm:$0xf]
        %v853 = vld [vmem:[%s368 + $0x28] sm:$0xf]
        %v854 = vld [vmem:[%s368 + $0x2c] sm:$0xf]
        %v855 = vld [vmem:[%s368 + $0x30] sm:$0xf]
        %v856 = vld [vmem:[%s368 + $0x34] sm:$0xf]
        %v857 = vld [vmem:[%s368 + $0x38] sm:$0xf]
        %v858 = vld [vmem:[%s368 + $0x3c] sm:$0xf]
        %v859 = vpack.c.bf16 %v784, %v781
        %v860 = vpack.c.bf16 %v792, %v789
        %v861 = vpack.c.bf16 %v800, %v797
        %v862 = vpack.c.bf16 %v808, %v805
        %v863 = vpack.c.bf16 %v816, %v813
        %v864 = vpack.c.bf16 %v824, %v821
        %v865 = vpack.c.bf16 %v832, %v829
        %v866 = vpack.c.bf16 %v840, %v837
        %v867 = vld [vmem:[#allocation10] sm:$0x1]
        %v869 = vlaneseq
        %v870 = vshrl.u32 %v869, 7
        %v871 = vsub.s32 0, %v870
        %v872 = vrot.slane %v867, %v871
        %v890 = vunpack.c.l.b16 %v843
        %v891 = vunpack.c.l.b16 %v844
        %v892 = vunpack.c.l.b16 %v845
        %v893 = vunpack.c.l.b16 %v846
        %v894 = vunpack.c.l.b16 %v847
        %v895 = vunpack.c.l.b16 %v848
        %v896 = vunpack.c.l.b16 %v849
        %v897 = vunpack.c.l.b16 %v850
        %v898 = vunpack.c.l.b16 %v851
        %v899 = vunpack.c.l.b16 %v852
        %v900 = vunpack.c.l.b16 %v853
        %v901 = vunpack.c.l.b16 %v854
        %v902 = vunpack.c.l.b16 %v855
        %v903 = vunpack.c.l.b16 %v856
        %v904 = vunpack.c.l.b16 %v857
        %v905 = vunpack.c.l.b16 %v858
        %v906 = vpack.c.b16 %v891, %v890
        %v907 = vpack.c.b16 %v893, %v892
        %v908 = vpack.c.b16 %v895, %v894
        %v909 = vpack.c.b16 %v897, %v896
        %v910 = vpack.c.b16 %v899, %v898
        %v911 = vpack.c.b16 %v901, %v900
        %v912 = vpack.c.b16 %v903, %v902
        %v913 = vpack.c.b16 %v905, %v904
        %922 = vmatprep.subr.bf16.mxu0 0
        %923 = vmatpush1.bf16.msra.mxu0 %v859
        %924 = vmatprep.subr.bf16.mxu0 0
        %925 = vmatpush1.bf16.msra.mxu0 %v860
        %926 = vmatprep.subr.bf16.mxu0 0
        %927 = vmatpush1.bf16.msra.mxu0 %v861
        %928 = vmatprep.subr.bf16.mxu0 0
        %929 = vmatpush1.bf16.msra.mxu0 %v862
        %930 = vmatprep.subr.bf16.mxu0 0
        %931 = vmatpush1.bf16.msra.mxu0 %v863
        %932 = vmatprep.subr.bf16.mxu0 0
        %933 = vmatpush1.bf16.msra.mxu0 %v864
        %934 = vmatprep.subr.bf16.mxu0 0
        %935 = vmatpush1.bf16.msra.mxu0 %v865
        %936 = vmatprep.subr.bf16.mxu0 0
        %937 = vmatpush1.bf16.msra.mxu0 %v866
        %938 = vmatprep.subr.bf16.mxu0 0
        %939 = vmatpush1.bf16.msra.mxu0 0
        %940 = vmatprep.subr.bf16.mxu0 0
        %941 = vmatpush1.bf16.msra.mxu0 0
        %942 = vmatprep.subr.bf16.mxu0 0
        %943 = vmatpush1.bf16.msra.mxu0 0
        %944 = vmatprep.subr.bf16.mxu0 0
        %945 = vmatpush1.bf16.msra.mxu0 0
        %946 = vmatprep.subr.bf16.mxu0 0
        %947 = vmatpush1.bf16.msra.mxu0 0
        %948 = vmatprep.subr.bf16.mxu0 0
        %949 = vmatpush1.bf16.msra.mxu0 0
        %950 = vmatprep.subr.bf16.mxu0 0
        %951 = vmatpush1.bf16.msra.mxu0 0
        %952 = vmatprep.subr.bf16.mxu0 0
        %953 = vmatpush1.bf16.msra.mxu0 0
        %954 = vmatprep.mubr.bf16.mxu0 0
        %955 = vmatmul.mubr.bf16.gmra.mrb[0].mxu0 %v906
        %v956 = vpop.f32.mrb[0].mxu0
        %v957 = vadd.f32 %v872, %v956
        %v958 = vpop.f32.mrb[0].mxu0
        %v959 = vpop.f32.mrb[0].mxu0
        %v960 = vadd.f32 %v872, %v959
        %v961 = vpop.f32.mrb[0].mxu0
        %962 = vmatprep.mubr.bf16.mxu0 0
        %963 = vmatmul.mubr.bf16.gmra.mrb[0].mxu0 %v907
        %v964 = vpop.f32.mrb[0].mxu0
        %v965 = vadd.f32 %v872, %v964
        %v966 = vpop.f32.mrb[0].mxu0
        %v967 = vpop.f32.mrb[0].mxu0
        %v968 = vadd.f32 %v872, %v967
        %v969 = vpop.f32.mrb[0].mxu0
        %970 = vmatprep.mubr.bf16.mxu0 0
        %971 = vmatmul.mubr.bf16.gmra.mrb[0].mxu0 %v908
        %v972 = vpop.f32.mrb[0].mxu0
        %v973 = vadd.f32 %v872, %v972
        %v974 = vpop.f32.mrb[0].mxu0
        %v975 = vpop.f32.mrb[0].mxu0
        %v976 = vadd.f32 %v872, %v975
        %v977 = vpop.f32.mrb[0].mxu0
        %978 = vmatprep.mubr.bf16.mxu0 0
        %979 = vmatmul.mubr.bf16.gmra.mrb[0].mxu0 %v909
        %v980 = vpop.f32.mrb[0].mxu0
        %v981 = vadd.f32 %v872, %v980
        %v982 = vpop.f32.mrb[0].mxu0
        %v983 = vpop.f32.mrb[0].mxu0
        %v984 = vadd.f32 %v872, %v983
        %v985 = vpop.f32.mrb[0].mxu0
        %986 = vmatprep.mubr.bf16.mxu0 0
        %987 = vmatmul.mubr.bf16.gmra.mrb[0].mxu0 %v910
        %v988 = vpop.f32.mrb[0].mxu0
        %v989 = vadd.f32 %v872, %v988
        %v990 = vpop.f32.mrb[0].mxu0
        %v991 = vpop.f32.mrb[0].mxu0
        %v992 = vadd.f32 %v872, %v991
        %v993 = vpop.f32.mrb[0].mxu0
        %994 = vmatprep.mubr.bf16.mxu0 0
        %995 = vmatmul.mubr.bf16.gmra.mrb[0].mxu0 %v911
        %v996 = vpop.f32.mrb[0].mxu0
        %v997 = vadd.f32 %v872, %v996
        %v998 = vpop.f32.mrb[0].mxu0
        %v999 = vpop.f32.mrb[0].mxu0
        %v1000 = vadd.f32 %v872, %v999
        %v1001 = vpop.f32.mrb[0].mxu0
        %1002 = vmatprep.mubr.bf16.mxu0 0
        %1003 = vmatmul.mubr.bf16.gmra.mrb[0].mxu0 %v912
        %v1004 = vpop.f32.mrb[0].mxu0
        %v1005 = vadd.f32 %v872, %v1004
        %v1006 = vpop.f32.mrb[0].mxu0
        %v1007 = vpop.f32.mrb[0].mxu0
        %v1008 = vadd.f32 %v872, %v1007
        %v1009 = vpop.f32.mrb[0].mxu0
        %1010 = vmatprep.mubr.bf16.mxu0 0
        %1011 = vmatmul.mubr.bf16.gmra.mrb[0].mxu0 %v913
        %v1012 = vpop.f32.mrb[0].mxu0
        %v1013 = vadd.f32 %v872, %v1012
        %v1014 = vpop.f32.mrb[0].mxu0
        %v1015 = vpop.f32.mrb[0].mxu0
        %v1016 = vadd.f32 %v872, %v1015
        %v1017 = vpop.f32.mrb[0].mxu0
        %1018 = vdwg.mxu0
        %v1019 = vmax.f32 %v957, 0.0
        %v1020 = vmax.f32 %v960, 0.0
        %v1021 = vmax.f32 %v965, 0.0
        %v1022 = vmax.f32 %v968, 0.0
        %v1023 = vmax.f32 %v973, 0.0
        %v1024 = vmax.f32 %v976, 0.0
        %v1025 = vmax.f32 %v981, 0.0
        %v1026 = vmax.f32 %v984, 0.0
        %v1027 = vmax.f32 %v989, 0.0
        %v1028 = vmax.f32 %v992, 0.0
        %v1029 = vmax.f32 %v997, 0.0
        %v1030 = vmax.f32 %v1000, 0.0
        %v1031 = vmax.f32 %v1005, 0.0
        %v1032 = vmax.f32 %v1008, 0.0
        %v1033 = vmax.f32 %v1013, 0.0
        %v1034 = vmax.f32 %v1016, 0.0
        %v1035 = vadd.f32 %v658, %v1019
        %v1036 = vadd.f32 %v659, %v1020
        %v1037 = vadd.f32 %v660, %v1021
        %v1038 = vadd.f32 %v661, %v1022
        %v1039 = vadd.f32 %v662, %v1023
        %v1040 = vadd.f32 %v663, %v1024
        %v1041 = vadd.f32 %v664, %v1025
        %v1042 = vadd.f32 %v665, %v1026
        %v1043 = vadd.f32 %v666, %v1027
        %v1044 = vadd.f32 %v667, %v1028
        %v1045 = vadd.f32 %v668, %v1029
        %v1046 = vadd.f32 %v669, %v1030
        %v1047 = vadd.f32 %v670, %v1031
        %v1048 = vadd.f32 %v671, %v1032
        %v1049 = vadd.f32 %v672, %v1033
        %v1050 = vadd.f32 %v673, %v1034
        %v1051 = vpack.c.bf16 %v1036, %v1035
        %v1052 = vpack.c.bf16 %v1038, %v1037
        %v1053 = vpack.c.bf16 %v1040, %v1039
        %v1054 = vpack.c.bf16 %v1042, %v1041
        %v1055 = vpack.c.bf16 %v1044, %v1043
        %v1056 = vpack.c.bf16 %v1046, %v1045
        %v1057 = vpack.c.bf16 %v1048, %v1047
        %v1058 = vpack.c.bf16 %v1050, %v1049
        %s1059 = scalar_lea.vmem [#allocation8], 64
        %v1060 = vld [vmem:[%s1059] sm:$0xf]
        %v1061 = vld [vmem:[%s1059 + $0x4] sm:$0xf]
        %v1062 = vld [vmem:[%s1059 + $0x8] sm:$0xf]
        %v1063 = vld [vmem:[%s1059 + $0xc] sm:$0xf]
        %v1064 = vld [vmem:[%s1059 + $0x10] sm:$0xf]
        %v1065 = vld [vmem:[%s1059 + $0x14] sm:$0xf]
        %v1066 = vld [vmem:[%s1059 + $0x18] sm:$0xf]
        %v1067 = vld [vmem:[%s1059 + $0x1c] sm:$0xf]
        %v1068 = vld [vmem:[%s1059 + $0x20] sm:$0xf]
        %v1069 = vld [vmem:[%s1059 + $0x24] sm:$0xf]
        %v1070 = vld [vmem:[%s1059 + $0x28] sm:$0xf]
        %v1071 = vld [vmem:[%s1059 + $0x2c] sm:$0xf]
        %v1072 = vld [vmem:[%s1059 + $0x30] sm:$0xf]
        %v1073 = vld [vmem:[%s1059 + $0x34] sm:$0xf]
        %v1074 = vld [vmem:[%s1059 + $0x38] sm:$0xf]
        %v1075 = vld [vmem:[%s1059 + $0x3c] sm:$0xf]
        %v1092 = vunpack.c.l.b16 %v1060
        %v1093 = vunpack.c.l.b16 %v1061
        %v1094 = vunpack.c.l.b16 %v1062
        %v1095 = vunpack.c.l.b16 %v1063
        %v1096 = vunpack.c.l.b16 %v1064
        %v1097 = vunpack.c.l.b16 %v1065
        %v1098 = vunpack.c.l.b16 %v1066
        %v1099 = vunpack.c.l.b16 %v1067
        %v1100 = vunpack.c.l.b16 %v1068
        %v1101 = vunpack.c.l.b16 %v1069
        %v1102 = vunpack.c.l.b16 %v1070
        %v1103 = vunpack.c.l.b16 %v1071
        %v1104 = vunpack.c.l.b16 %v1072
        %v1105 = vunpack.c.l.b16 %v1073
        %v1106 = vunpack.c.l.b16 %v1074
        %v1107 = vunpack.c.l.b16 %v1075
        %v1108 = vpack.c.b16 %v1093, %v1092
        %v1109 = vpack.c.b16 %v1095, %v1094
        %v1110 = vpack.c.b16 %v1097, %v1096
        %v1111 = vpack.c.b16 %v1099, %v1098
        %v1112 = vpack.c.b16 %v1101, %v1100
        %v1113 = vpack.c.b16 %v1103, %v1102
        %v1114 = vpack.c.b16 %v1105, %v1104
        %v1115 = vpack.c.b16 %v1107, %v1106
        %1124 = vmatprep.subr.bf16.mxu0 0
        %1125 = vmatpush1.bf16.msra.mxu0 %v1108
        %1126 = vmatprep.subr.bf16.mxu0 0
        %1127 = vmatpush1.bf16.msra.mxu0 %v1109
        %1128 = vmatprep.subr.bf16.mxu0 0
        %1129 = vmatpush1.bf16.msra.mxu0 %v1110
        %1130 = vmatprep.subr.bf16.mxu0 0
        %1131 = vmatpush1.bf16.msra.mxu0 %v1111
        %1132 = vmatprep.subr.bf16.mxu0 0
        %1133 = vmatpush1.bf16.msra.mxu0 %v1112
        %1134 = vmatprep.subr.bf16.mxu0 0
        %1135 = vmatpush1.bf16.msra.mxu0 %v1113
        %1136 = vmatprep.subr.bf16.mxu0 0
        %1137 = vmatpush1.bf16.msra.mxu0 %v1114
        %1138 = vmatprep.subr.bf16.mxu0 0
        %1139 = vmatpush1.bf16.msra.mxu0 %v1115
        %1140 = vmatprep.subr.bf16.mxu0 0
        %1141 = vmatpush1.bf16.msra.mxu0 0
        %1142 = vmatprep.subr.bf16.mxu0 0
        %1143 = vmatpush1.bf16.msra.mxu0 0
        %1144 = vmatprep.subr.bf16.mxu0 0
        %1145 = vmatpush1.bf16.msra.mxu0 0
        %1146 = vmatprep.subr.bf16.mxu0 0
        %1147 = vmatpush1.bf16.msra.mxu0 0
        %1148 = vmatprep.subr.bf16.mxu0 0
        %1149 = vmatpush1.bf16.msra.mxu0 0
        %1150 = vmatprep.subr.bf16.mxu0 0
        %1151 = vmatpush1.bf16.msra.mxu0 0
        %1152 = vmatprep.subr.bf16.mxu0 0
        %1153 = vmatpush1.bf16.msra.mxu0 0
        %1154 = vmatprep.subr.bf16.mxu0 0
        %1155 = vmatpush1.bf16.msra.mxu0 0
        %1156 = vmatprep.mubr.bf16.mxu0 0
        %1157 = vmatmul.mubr.bf16.gmra.mrb[0].mxu0 %v1051
        %v1158 = vpop.f32.mrb[0].mxu0
        %v1159 = vadd.f32 0.0, %v1158
        %v1160 = vpop.f32.mrb[0].mxu0
        %v1161 = vpop.f32.mrb[0].mxu0
        %v1162 = vadd.f32 0.0, %v1161
        %v1163 = vpop.f32.mrb[0].mxu0
        %1164 = vmatprep.mubr.bf16.mxu0 0
        %1165 = vmatmul.mubr.bf16.gmra.mrb[0].mxu0 %v1052
        %v1166 = vpop.f32.mrb[0].mxu0
        %v1167 = vadd.f32 0.0, %v1166
        %v1168 = vpop.f32.mrb[0].mxu0
        %v1169 = vpop.f32.mrb[0].mxu0
        %v1170 = vadd.f32 0.0, %v1169
        %v1171 = vpop.f32.mrb[0].mxu0
        %1172 = vmatprep.mubr.bf16.mxu0 0
        %1173 = vmatmul.mubr.bf16.gmra.mrb[0].mxu0 %v1053
        %v1174 = vpop.f32.mrb[0].mxu0
        %v1175 = vadd.f32 0.0, %v1174
        %v1176 = vpop.f32.mrb[0].mxu0
        %v1177 = vpop.f32.mrb[0].mxu0
        %v1178 = vadd.f32 0.0, %v1177
        %v1179 = vpop.f32.mrb[0].mxu0
        %1180 = vmatprep.mubr.bf16.mxu0 0
        %1181 = vmatmul.mubr.bf16.gmra.mrb[0].mxu0 %v1054
        %v1182 = vpop.f32.mrb[0].mxu0
        %v1183 = vadd.f32 0.0, %v1182
        %v1184 = vpop.f32.mrb[0].mxu0
        %v1185 = vpop.f32.mrb[0].mxu0
        %v1186 = vadd.f32 0.0, %v1185
        %v1187 = vpop.f32.mrb[0].mxu0
        %1188 = vmatprep.mubr.bf16.mxu0 0
        %1189 = vmatmul.mubr.bf16.gmra.mrb[0].mxu0 %v1055
        %v1190 = vpop.f32.mrb[0].mxu0
        %v1191 = vadd.f32 0.0, %v1190
        %v1192 = vpop.f32.mrb[0].mxu0
        %v1193 = vpop.f32.mrb[0].mxu0
        %v1194 = vadd.f32 0.0, %v1193
        %v1195 = vpop.f32.mrb[0].mxu0
        %1196 = vmatprep.mubr.bf16.mxu0 0
        %1197 = vmatmul.mubr.bf16.gmra.mrb[0].mxu0 %v1056
        %v1198 = vpop.f32.mrb[0].mxu0
        %v1199 = vadd.f32 0.0, %v1198
        %v1200 = vpop.f32.mrb[0].mxu0
        %v1201 = vpop.f32.mrb[0].mxu0
        %v1202 = vadd.f32 0.0, %v1201
        %v1203 = vpop.f32.mrb[0].mxu0
        %1204 = vmatprep.mubr.bf16.mxu0 0
        %1205 = vmatmul.mubr.bf16.gmra.mrb[0].mxu0 %v1057
        %v1206 = vpop.f32.mrb[0].mxu0
        %v1207 = vadd.f32 0.0, %v1206
        %v1208 = vpop.f32.mrb[0].mxu0
        %v1209 = vpop.f32.mrb[0].mxu0
        %v1210 = vadd.f32 0.0, %v1209
        %v1211 = vpop.f32.mrb[0].mxu0
        %1212 = vmatprep.mubr.bf16.mxu0 0
        %1213 = vmatmul.mubr.bf16.gmra.mrb[0].mxu0 %v1058
        %v1214 = vpop.f32.mrb[0].mxu0
        %v1215 = vadd.f32 0.0, %v1214
        %v1216 = vpop.f32.mrb[0].mxu0
        %v1217 = vpop.f32.mrb[0].mxu0
        %v1218 = vadd.f32 0.0, %v1217
        %v1219 = vpop.f32.mrb[0].mxu0
        %1220 = vdwg.mxu0
        %v1221 = vpack.c.bf16 %v1162, %v1159
        %v1222 = vpack.c.bf16 %v1170, %v1167
        %v1223 = vpack.c.bf16 %v1178, %v1175
        %v1224 = vpack.c.bf16 %v1186, %v1183
        %v1225 = vpack.c.bf16 %v1194, %v1191
        %v1226 = vpack.c.bf16 %v1202, %v1199
        %v1227 = vpack.c.bf16 %v1210, %v1207
        %v1228 = vpack.c.bf16 %v1218, %v1215
        %s1229 = scalar_lea.vmem [#allocation10], 1
        %v1230 = vld [vmem:[%s1229] sm:$0x1]
        %v1232 = vlaneseq
        %v1233 = vshrl.u32 %v1232, 7
        %v1234 = vsub.s32 0, %v1233
        %v1235 = vrot.slane %v1230, %v1234
        %1237 = vmatprep.subr.bf16.mxu0 0
        %1238 = vmatpush1.bf16.msra.mxu0 %v1221
        %1239 = vmatprep.subr.bf16.mxu0 0
        %1240 = vmatpush1.bf16.msra.mxu0 %v1222
        %1241 = vmatprep.subr.bf16.mxu0 0
        %1242 = vmatpush1.bf16.msra.mxu0 %v1223
        %1243 = vmatprep.subr.bf16.mxu0 0
        %1244 = vmatpush1.bf16.msra.mxu0 %v1224
        %1245 = vmatprep.subr.bf16.mxu0 0
        %1246 = vmatpush1.bf16.msra.mxu0 %v1225
        %1247 = vmatprep.subr.bf16.mxu0 0
        %1248 = vmatpush1.bf16.msra.mxu0 %v1226
        %1249 = vmatprep.subr.bf16.mxu0 0
        %1250 = vmatpush1.bf16.msra.mxu0 %v1227
        %1251 = vmatprep.subr.bf16.mxu0 0
        %1252 = vmatpush1.bf16.msra.mxu0 %v1228
        %1253 = vmatprep.subr.bf16.mxu0 0
        %1254 = vmatpush1.bf16.msra.mxu0 0
        %1255 = vmatprep.subr.bf16.mxu0 0
        %1256 = vmatpush1.bf16.msra.mxu0 0
        %1257 = vmatprep.subr.bf16.mxu0 0
        %1258 = vmatpush1.bf16.msra.mxu0 0
        %1259 = vmatprep.subr.bf16.mxu0 0
        %1260 = vmatpush1.bf16.msra.mxu0 0
        %1261 = vmatprep.subr.bf16.mxu0 0
        %1262 = vmatpush1.bf16.msra.mxu0 0
        %1263 = vmatprep.subr.bf16.mxu0 0
        %1264 = vmatpush1.bf16.msra.mxu0 0
        %1265 = vmatprep.subr.bf16.mxu0 0
        %1266 = vmatpush1.bf16.msra.mxu0 0
        %1267 = vmatprep.subr.bf16.mxu0 0
        %1268 = vmatpush1.bf16.msra.mxu0 0
        %1269 = vmatprep.mubr.bf16.mxu0 0
        %1270 = vmatmul.mubr.bf16.gmra.mrb[0].mxu0 %v906
        %v1271 = vpop.f32.mrb[0].mxu0
        %v1272 = vadd.f32 %v1235, %v1271
        %v1273 = vpop.f32.mrb[0].mxu0
        %v1274 = vpop.f32.mrb[0].mxu0
        %v1275 = vadd.f32 %v1235, %v1274
        %v1276 = vpop.f32.mrb[0].mxu0
        %1277 = vmatprep.mubr.bf16.mxu0 0
        %1278 = vmatmul.mubr.bf16.gmra.mrb[0].mxu0 %v907
        %v1279 = vpop.f32.mrb[0].mxu0
        %v1280 = vadd.f32 %v1235, %v1279
        %v1281 = vpop.f32.mrb[0].mxu0
        %v1282 = vpop.f32.mrb[0].mxu0
        %v1283 = vadd.f32 %v1235, %v1282
        %v1284 = vpop.f32.mrb[0].mxu0
        %1285 = vmatprep.mubr.bf16.mxu0 0
        %1286 = vmatmul.mubr.bf16.gmra.mrb[0].mxu0 %v908
        %v1287 = vpop.f32.mrb[0].mxu0
        %v1288 = vadd.f32 %v1235, %v1287
        %v1289 = vpop.f32.mrb[0].mxu0
        %v1290 = vpop.f32.mrb[0].mxu0
        %v1291 = vadd.f32 %v1235, %v1290
        %v1292 = vpop.f32.mrb[0].mxu0
        %1293 = vmatprep.mubr.bf16.mxu0 0
        %1294 = vmatmul.mubr.bf16.gmra.mrb[0].mxu0 %v909
        %v1295 = vpop.f32.mrb[0].mxu0
        %v1296 = vadd.f32 %v1235, %v1295
        %v1297 = vpop.f32.mrb[0].mxu0
        %v1298 = vpop.f32.mrb[0].mxu0
        %v1299 = vadd.f32 %v1235, %v1298
        %v1300 = vpop.f32.mrb[0].mxu0
        %1301 = vmatprep.mubr.bf16.mxu0 0
        %1302 = vmatmul.mubr.bf16.gmra.mrb[0].mxu0 %v910
        %v1303 = vpop.f32.mrb[0].mxu0
        %v1304 = vadd.f32 %v1235, %v1303
        %v1305 = vpop.f32.mrb[0].mxu0
        %v1306 = vpop.f32.mrb[0].mxu0
        %v1307 = vadd.f32 %v1235, %v1306
        %v1308 = vpop.f32.mrb[0].mxu0
        %1309 = vmatprep.mubr.bf16.mxu0 0
        %1310 = vmatmul.mubr.bf16.gmra.mrb[0].mxu0 %v911
        %v1311 = vpop.f32.mrb[0].mxu0
        %v1312 = vadd.f32 %v1235, %v1311
        %v1313 = vpop.f32.mrb[0].mxu0
        %v1314 = vpop.f32.mrb[0].mxu0
        %v1315 = vadd.f32 %v1235, %v1314
        %v1316 = vpop.f32.mrb[0].mxu0
        %1317 = vmatprep.mubr.bf16.mxu0 0
        %1318 = vmatmul.mubr.bf16.gmra.mrb[0].mxu0 %v912
        %v1319 = vpop.f32.mrb[0].mxu0
        %v1320 = vadd.f32 %v1235, %v1319
        %v1321 = vpop.f32.mrb[0].mxu0
        %v1322 = vpop.f32.mrb[0].mxu0
        %v1323 = vadd.f32 %v1235, %v1322
        %v1324 = vpop.f32.mrb[0].mxu0
        %1325 = vmatprep.mubr.bf16.mxu0 0
        %1326 = vmatmul.mubr.bf16.gmra.mrb[0].mxu0 %v913
        %v1327 = vpop.f32.mrb[0].mxu0
        %v1328 = vadd.f32 %v1235, %v1327
        %v1329 = vpop.f32.mrb[0].mxu0
        %v1330 = vpop.f32.mrb[0].mxu0
        %v1331 = vadd.f32 %v1235, %v1330
        %v1332 = vpop.f32.mrb[0].mxu0
        %1333 = vdwg.mxu0
        %v1334 = vmax.f32 %v1272, 0.0
        %v1335 = vmax.f32 %v1275, 0.0
        %v1336 = vmax.f32 %v1280, 0.0
        %v1337 = vmax.f32 %v1283, 0.0
        %v1338 = vmax.f32 %v1288, 0.0
        %v1339 = vmax.f32 %v1291, 0.0
        %v1340 = vmax.f32 %v1296, 0.0
        %v1341 = vmax.f32 %v1299, 0.0
        %v1342 = vmax.f32 %v1304, 0.0
        %v1343 = vmax.f32 %v1307, 0.0
        %v1344 = vmax.f32 %v1312, 0.0
        %v1345 = vmax.f32 %v1315, 0.0
        %v1346 = vmax.f32 %v1320, 0.0
        %v1347 = vmax.f32 %v1323, 0.0
        %v1348 = vmax.f32 %v1328, 0.0
        %v1349 = vmax.f32 %v1331, 0.0
        %v1350 = vadd.f32 %v1035, %v1334
        %v1351 = vadd.f32 %v1036, %v1335
        %v1352 = vadd.f32 %v1037, %v1336
        %v1353 = vadd.f32 %v1038, %v1337
        %v1354 = vadd.f32 %v1039, %v1338
        %v1355 = vadd.f32 %v1040, %v1339
        %v1356 = vadd.f32 %v1041, %v1340
        %v1357 = vadd.f32 %v1042, %v1341
        %v1358 = vadd.f32 %v1043, %v1342
        %v1359 = vadd.f32 %v1044, %v1343
        %v1360 = vadd.f32 %v1045, %v1344
        %v1361 = vadd.f32 %v1046, %v1345
        %v1362 = vadd.f32 %v1047, %v1346
        %v1363 = vadd.f32 %v1048, %v1347
        %v1364 = vadd.f32 %v1049, %v1348
        %v1365 = vadd.f32 %v1050, %v1349
        %v1366 = vpack.c.bf16 %v1351, %v1350
        %v1367 = vpack.c.bf16 %v1353, %v1352
        %v1368 = vpack.c.bf16 %v1355, %v1354
        %v1369 = vpack.c.bf16 %v1357, %v1356
        %v1370 = vpack.c.bf16 %v1359, %v1358
        %v1371 = vpack.c.bf16 %v1361, %v1360
        %v1372 = vpack.c.bf16 %v1363, %v1362
        %v1373 = vpack.c.bf16 %v1365, %v1364
        %s1374 = scalar_lea.vmem [#allocation8], 128
        %v1375 = vld [vmem:[%s1374] sm:$0xf]
        %v1376 = vld [vmem:[%s1374 + $0x4] sm:$0xf]
        %v1377 = vld [vmem:[%s1374 + $0x8] sm:$0xf]
        %v1378 = vld [vmem:[%s1374 + $0xc] sm:$0xf]
        %v1379 = vld [vmem:[%s1374 + $0x10] sm:$0xf]
        %v1380 = vld [vmem:[%s1374 + $0x14] sm:$0xf]
        %v1381 = vld [vmem:[%s1374 + $0x18] sm:$0xf]
        %v1382 = vld [vmem:[%s1374 + $0x1c] sm:$0xf]
        %v1383 = vld [vmem:[%s1374 + $0x20] sm:$0xf]
        %v1384 = vld [vmem:[%s1374 + $0x24] sm:$0xf]
        %v1385 = vld [vmem:[%s1374 + $0x28] sm:$0xf]
        %v1386 = vld [vmem:[%s1374 + $0x2c] sm:$0xf]
        %v1387 = vld [vmem:[%s1374 + $0x30] sm:$0xf]
        %v1388 = vld [vmem:[%s1374 + $0x34] sm:$0xf]
        %v1389 = vld [vmem:[%s1374 + $0x38] sm:$0xf]
        %v1390 = vld [vmem:[%s1374 + $0x3c] sm:$0xf]
        %v1407 = vunpack.c.l.b16 %v1375
        %v1408 = vunpack.c.l.b16 %v1376
        %v1409 = vunpack.c.l.b16 %v1377
        %v1410 = vunpack.c.l.b16 %v1378
        %v1411 = vunpack.c.l.b16 %v1379
        %v1412 = vunpack.c.l.b16 %v1380
        %v1413 = vunpack.c.l.b16 %v1381
        %v1414 = vunpack.c.l.b16 %v1382
        %v1415 = vunpack.c.l.b16 %v1383
        %v1416 = vunpack.c.l.b16 %v1384
        %v1417 = vunpack.c.l.b16 %v1385
        %v1418 = vunpack.c.l.b16 %v1386
        %v1419 = vunpack.c.l.b16 %v1387
        %v1420 = vunpack.c.l.b16 %v1388
        %v1421 = vunpack.c.l.b16 %v1389
        %v1422 = vunpack.c.l.b16 %v1390
        %v1423 = vpack.c.b16 %v1408, %v1407
        %v1424 = vpack.c.b16 %v1410, %v1409
        %v1425 = vpack.c.b16 %v1412, %v1411
        %v1426 = vpack.c.b16 %v1414, %v1413
        %v1427 = vpack.c.b16 %v1416, %v1415
        %v1428 = vpack.c.b16 %v1418, %v1417
        %v1429 = vpack.c.b16 %v1420, %v1419
        %v1430 = vpack.c.b16 %v1422, %v1421
        %1439 = vmatprep.subr.bf16.mxu0 0
        %1440 = vmatpush1.bf16.msra.mxu0 %v1423
        %1441 = vmatprep.subr.bf16.mxu0 0
        %1442 = vmatpush1.bf16.msra.mxu0 %v1424
        %1443 = vmatprep.subr.bf16.mxu0 0
        %1444 = vmatpush1.bf16.msra.mxu0 %v1425
        %1445 = vmatprep.subr.bf16.mxu0 0
        %1446 = vmatpush1.bf16.msra.mxu0 %v1426
        %1447 = vmatprep.subr.bf16.mxu0 0
        %1448 = vmatpush1.bf16.msra.mxu0 %v1427
        %1449 = vmatprep.subr.bf16.mxu0 0
        %1450 = vmatpush1.bf16.msra.mxu0 %v1428
        %1451 = vmatprep.subr.bf16.mxu0 0
        %1452 = vmatpush1.bf16.msra.mxu0 %v1429
        %1453 = vmatprep.subr.bf16.mxu0 0
        %1454 = vmatpush1.bf16.msra.mxu0 %v1430
        %1455 = vmatprep.subr.bf16.mxu0 0
        %1456 = vmatpush1.bf16.msra.mxu0 0
        %1457 = vmatprep.subr.bf16.mxu0 0
        %1458 = vmatpush1.bf16.msra.mxu0 0
        %1459 = vmatprep.subr.bf16.mxu0 0
        %1460 = vmatpush1.bf16.msra.mxu0 0
        %1461 = vmatprep.subr.bf16.mxu0 0
        %1462 = vmatpush1.bf16.msra.mxu0 0
        %1463 = vmatprep.subr.bf16.mxu0 0
        %1464 = vmatpush1.bf16.msra.mxu0 0
        %1465 = vmatprep.subr.bf16.mxu0 0
        %1466 = vmatpush1.bf16.msra.mxu0 0
        %1467 = vmatprep.subr.bf16.mxu0 0
        %1468 = vmatpush1.bf16.msra.mxu0 0
        %1469 = vmatprep.subr.bf16.mxu0 0
        %1470 = vmatpush1.bf16.msra.mxu0 0
        %1471 = vmatprep.mubr.bf16.mxu0 0
        %1472 = vmatmul.mubr.bf16.gmra.mrb[0].mxu0 %v1366
        %v1473 = vpop.f32.mrb[0].mxu0
        %v1474 = vadd.f32 0.0, %v1473
        %v1475 = vpop.f32.mrb[0].mxu0
        %v1476 = vpop.f32.mrb[0].mxu0
        %v1477 = vadd.f32 0.0, %v1476
        %v1478 = vpop.f32.mrb[0].mxu0
        %1479 = vmatprep.mubr.bf16.mxu0 0
        %1480 = vmatmul.mubr.bf16.gmra.mrb[0].mxu0 %v1367
        %v1481 = vpop.f32.mrb[0].mxu0
        %v1482 = vadd.f32 0.0, %v1481
        %v1483 = vpop.f32.mrb[0].mxu0
        %v1484 = vpop.f32.mrb[0].mxu0
        %v1485 = vadd.f32 0.0, %v1484
        %v1486 = vpop.f32.mrb[0].mxu0
        %1487 = vmatprep.mubr.bf16.mxu0 0
        %1488 = vmatmul.mubr.bf16.gmra.mrb[0].mxu0 %v1368
        %v1489 = vpop.f32.mrb[0].mxu0
        %v1490 = vadd.f32 0.0, %v1489
        %v1491 = vpop.f32.mrb[0].mxu0
        %v1492 = vpop.f32.mrb[0].mxu0
        %v1493 = vadd.f32 0.0, %v1492
        %v1494 = vpop.f32.mrb[0].mxu0
        %1495 = vmatprep.mubr.bf16.mxu0 0
        %1496 = vmatmul.mubr.bf16.gmra.mrb[0].mxu0 %v1369
        %v1497 = vpop.f32.mrb[0].mxu0
        %v1498 = vadd.f32 0.0, %v1497
        %v1499 = vpop.f32.mrb[0].mxu0
        %v1500 = vpop.f32.mrb[0].mxu0
        %v1501 = vadd.f32 0.0, %v1500
        %v1502 = vpop.f32.mrb[0].mxu0
        %1503 = vmatprep.mubr.bf16.mxu0 0
        %1504 = vmatmul.mubr.bf16.gmra.mrb[0].mxu0 %v1370
        %v1505 = vpop.f32.mrb[0].mxu0
        %v1506 = vadd.f32 0.0, %v1505
        %v1507 = vpop.f32.mrb[0].mxu0
        %v1508 = vpop.f32.mrb[0].mxu0
        %v1509 = vadd.f32 0.0, %v1508
        %v1510 = vpop.f32.mrb[0].mxu0
        %1511 = vmatprep.mubr.bf16.mxu0 0
        %1512 = vmatmul.mubr.bf16.gmra.mrb[0].mxu0 %v1371
        %v1513 = vpop.f32.mrb[0].mxu0
        %v1514 = vadd.f32 0.0, %v1513
        %v1515 = vpop.f32.mrb[0].mxu0
        %v1516 = vpop.f32.mrb[0].mxu0
        %v1517 = vadd.f32 0.0, %v1516
        %v1518 = vpop.f32.mrb[0].mxu0
        %1519 = vmatprep.mubr.bf16.mxu0 0
        %1520 = vmatmul.mubr.bf16.gmra.mrb[0].mxu0 %v1372
        %v1521 = vpop.f32.mrb[0].mxu0
        %v1522 = vadd.f32 0.0, %v1521
        %v1523 = vpop.f32.mrb[0].mxu0
        %v1524 = vpop.f32.mrb[0].mxu0
        %v1525 = vadd.f32 0.0, %v1524
        %v1526 = vpop.f32.mrb[0].mxu0
        %1527 = vmatprep.mubr.bf16.mxu0 0
        %1528 = vmatmul.mubr.bf16.gmra.mrb[0].mxu0 %v1373
        %v1529 = vpop.f32.mrb[0].mxu0
        %v1530 = vadd.f32 0.0, %v1529
        %v1531 = vpop.f32.mrb[0].mxu0
        %v1532 = vpop.f32.mrb[0].mxu0
        %v1533 = vadd.f32 0.0, %v1532
        %v1534 = vpop.f32.mrb[0].mxu0
        %1535 = vdwg.mxu0
        %v1536 = vpack.c.bf16 %v1477, %v1474
        %v1537 = vpack.c.bf16 %v1485, %v1482
        %v1538 = vpack.c.bf16 %v1493, %v1490
        %v1539 = vpack.c.bf16 %v1501, %v1498
        %v1540 = vpack.c.bf16 %v1509, %v1506
        %v1541 = vpack.c.bf16 %v1517, %v1514
        %v1542 = vpack.c.bf16 %v1525, %v1522
        %v1543 = vpack.c.bf16 %v1533, %v1530
        %s1544 = scalar_lea.vmem [#allocation10], 2
        %v1545 = vld [vmem:[%s1544] sm:$0x1]
        %v1547 = vlaneseq
        %v1548 = vshrl.u32 %v1547, 7
        %v1549 = vsub.s32 0, %v1548
        %v1550 = vrot.slane %v1545, %v1549
        %1552 = vmatprep.subr.bf16.mxu0 0
        %1553 = vmatpush1.bf16.msra.mxu0 %v1536
        %1554 = vmatprep.subr.bf16.mxu0 0
        %1555 = vmatpush1.bf16.msra.mxu0 %v1537
        %1556 = vmatprep.subr.bf16.mxu0 0
        %1557 = vmatpush1.bf16.msra.mxu0 %v1538
        %1558 = vmatprep.subr.bf16.mxu0 0
        %1559 = vmatpush1.bf16.msra.mxu0 %v1539
        %1560 = vmatprep.subr.bf16.mxu0 0
        %1561 = vmatpush1.bf16.msra.mxu0 %v1540
        %1562 = vmatprep.subr.bf16.mxu0 0
        %1563 = vmatpush1.bf16.msra.mxu0 %v1541
        %1564 = vmatprep.subr.bf16.mxu0 0
        %1565 = vmatpush1.bf16.msra.mxu0 %v1542
        %1566 = vmatprep.subr.bf16.mxu0 0
        %1567 = vmatpush1.bf16.msra.mxu0 %v1543
        %1568 = vmatprep.subr.bf16.mxu0 0
        %1569 = vmatpush1.bf16.msra.mxu0 0
        %1570 = vmatprep.subr.bf16.mxu0 0
        %1571 = vmatpush1.bf16.msra.mxu0 0
        %1572 = vmatprep.subr.bf16.mxu0 0
        %1573 = vmatpush1.bf16.msra.mxu0 0
        %1574 = vmatprep.subr.bf16.mxu0 0
        %1575 = vmatpush1.bf16.msra.mxu0 0
        %1576 = vmatprep.subr.bf16.mxu0 0
        %1577 = vmatpush1.bf16.msra.mxu0 0
        %1578 = vmatprep.subr.bf16.mxu0 0
        %1579 = vmatpush1.bf16.msra.mxu0 0
        %1580 = vmatprep.subr.bf16.mxu0 0
        %1581 = vmatpush1.bf16.msra.mxu0 0
        %1582 = vmatprep.subr.bf16.mxu0 0
        %1583 = vmatpush1.bf16.msra.mxu0 0
        %1584 = vmatprep.mubr.bf16.mxu0 0
        %1585 = vmatmul.mubr.bf16.gmra.mrb[0].mxu0 %v906
        %v1586 = vpop.f32.mrb[0].mxu0
        %v1587 = vadd.f32 %v1550, %v1586
        %v1588 = vpop.f32.mrb[0].mxu0
        %v1589 = vpop.f32.mrb[0].mxu0
        %v1590 = vadd.f32 %v1550, %v1589
        %v1591 = vpop.f32.mrb[0].mxu0
        %1592 = vmatprep.mubr.bf16.mxu0 0
        %1593 = vmatmul.mubr.bf16.gmra.mrb[0].mxu0 %v907
        %v1594 = vpop.f32.mrb[0].mxu0
        %v1595 = vadd.f32 %v1550, %v1594
        %v1596 = vpop.f32.mrb[0].mxu0
        %v1597 = vpop.f32.mrb[0].mxu0
        %v1598 = vadd.f32 %v1550, %v1597
        %v1599 = vpop.f32.mrb[0].mxu0
        %1600 = vmatprep.mubr.bf16.mxu0 0
        %1601 = vmatmul.mubr.bf16.gmra.mrb[0].mxu0 %v908
        %v1602 = vpop.f32.mrb[0].mxu0
        %v1603 = vadd.f32 %v1550, %v1602
        %v1604 = vpop.f32.mrb[0].mxu0
        %v1605 = vpop.f32.mrb[0].mxu0
        %v1606 = vadd.f32 %v1550, %v1605
        %v1607 = vpop.f32.mrb[0].mxu0
        %1608 = vmatprep.mubr.bf16.mxu0 0
        %1609 = vmatmul.mubr.bf16.gmra.mrb[0].mxu0 %v909
        %v1610 = vpop.f32.mrb[0].mxu0
        %v1611 = vadd.f32 %v1550, %v1610
        %v1612 = vpop.f32.mrb[0].mxu0
        %v1613 = vpop.f32.mrb[0].mxu0
        %v1614 = vadd.f32 %v1550, %v1613
        %v1615 = vpop.f32.mrb[0].mxu0
        %1616 = vmatprep.mubr.bf16.mxu0 0
        %1617 = vmatmul.mubr.bf16.gmra.mrb[0].mxu0 %v910
        %v1618 = vpop.f32.mrb[0].mxu0
        %v1619 = vadd.f32 %v1550, %v1618
        %v1620 = vpop.f32.mrb[0].mxu0
        %v1621 = vpop.f32.mrb[0].mxu0
        %v1622 = vadd.f32 %v1550, %v1621
        %v1623 = vpop.f32.mrb[0].mxu0
        %1624 = vmatprep.mubr.bf16.mxu0 0
        %1625 = vmatmul.mubr.bf16.gmra.mrb[0].mxu0 %v911
        %v1626 = vpop.f32.mrb[0].mxu0
        %v1627 = vadd.f32 %v1550, %v1626
        %v1628 = vpop.f32.mrb[0].mxu0
        %v1629 = vpop.f32.mrb[0].mxu0
        %v1630 = vadd.f32 %v1550, %v1629
        %v1631 = vpop.f32.mrb[0].mxu0
        %1632 = vmatprep.mubr.bf16.mxu0 0
        %1633 = vmatmul.mubr.bf16.gmra.mrb[0].mxu0 %v912
        %v1634 = vpop.f32.mrb[0].mxu0
        %v1635 = vadd.f32 %v1550, %v1634
        %v1636 = vpop.f32.mrb[0].mxu0
        %v1637 = vpop.f32.mrb[0].mxu0
        %v1638 = vadd.f32 %v1550, %v1637
        %v1639 = vpop.f32.mrb[0].mxu0
        %1640 = vmatprep.mubr.bf16.mxu0 0
        %1641 = vmatmul.mubr.bf16.gmra.mrb[0].mxu0 %v913
        %v1642 = vpop.f32.mrb[0].mxu0
        %v1643 = vadd.f32 %v1550, %v1642
        %v1644 = vpop.f32.mrb[0].mxu0
        %v1645 = vpop.f32.mrb[0].mxu0
        %v1646 = vadd.f32 %v1550, %v1645
        %v1647 = vpop.f32.mrb[0].mxu0
        %1648 = vdwg.mxu0
        %v1649 = vmax.f32 %v1587, 0.0
        %v1650 = vmax.f32 %v1590, 0.0
        %v1651 = vmax.f32 %v1595, 0.0
        %v1652 = vmax.f32 %v1598, 0.0
        %v1653 = vmax.f32 %v1603, 0.0
        %v1654 = vmax.f32 %v1606, 0.0
        %v1655 = vmax.f32 %v1611, 0.0
        %v1656 = vmax.f32 %v1614, 0.0
        %v1657 = vmax.f32 %v1619, 0.0
        %v1658 = vmax.f32 %v1622, 0.0
        %v1659 = vmax.f32 %v1627, 0.0
        %v1660 = vmax.f32 %v1630, 0.0
        %v1661 = vmax.f32 %v1635, 0.0
        %v1662 = vmax.f32 %v1638, 0.0
        %v1663 = vmax.f32 %v1643, 0.0
        %v1664 = vmax.f32 %v1646, 0.0
        %v1665 = vadd.f32 %v1350, %v1649
        %v1666 = vadd.f32 %v1351, %v1650
        %v1667 = vadd.f32 %v1352, %v1651
        %v1668 = vadd.f32 %v1353, %v1652
        %v1669 = vadd.f32 %v1354, %v1653
        %v1670 = vadd.f32 %v1355, %v1654
        %v1671 = vadd.f32 %v1356, %v1655
        %v1672 = vadd.f32 %v1357, %v1656
        %v1673 = vadd.f32 %v1358, %v1657
        %v1674 = vadd.f32 %v1359, %v1658
        %v1675 = vadd.f32 %v1360, %v1659
        %v1676 = vadd.f32 %v1361, %v1660
        %v1677 = vadd.f32 %v1362, %v1661
        %v1678 = vadd.f32 %v1363, %v1662
        %v1679 = vadd.f32 %v1364, %v1663
        %v1680 = vadd.f32 %v1365, %v1664
        %v1681 = vpack.c.bf16 %v1666, %v1665
        %v1682 = vpack.c.bf16 %v1668, %v1667
        %v1683 = vpack.c.bf16 %v1670, %v1669
        %v1684 = vpack.c.bf16 %v1672, %v1671
        %v1685 = vpack.c.bf16 %v1674, %v1673
        %v1686 = vpack.c.bf16 %v1676, %v1675
        %v1687 = vpack.c.bf16 %v1678, %v1677
        %v1688 = vpack.c.bf16 %v1680, %v1679
        %v1689 = vld [vmem:[#allocation11] sm:$0xf]
        %v1690 = vld [vmem:[#allocation11 + $0x4] sm:$0xf]
        %v1691 = vld [vmem:[#allocation11 + $0x8] sm:$0xf]
        %v1692 = vld [vmem:[#allocation11 + $0xc] sm:$0xf]
        %v1693 = vld [vmem:[#allocation11 + $0x10] sm:$0xf]
        %v1694 = vld [vmem:[#allocation11 + $0x14] sm:$0xf]
        %v1695 = vld [vmem:[#allocation11 + $0x18] sm:$0xf]
        %v1696 = vld [vmem:[#allocation11 + $0x1c] sm:$0xf]
        %v1697 = vld [vmem:[#allocation11 + $0x20] sm:$0xf]
        %v1698 = vld [vmem:[#allocation11 + $0x24] sm:$0xf]
        %v1699 = vld [vmem:[#allocation11 + $0x28] sm:$0xf]
        %v1700 = vld [vmem:[#allocation11 + $0x2c] sm:$0xf]
        %v1701 = vld [vmem:[#allocation11 + $0x30] sm:$0xf]
        %v1702 = vld [vmem:[#allocation11 + $0x34] sm:$0xf]
        %v1703 = vld [vmem:[#allocation11 + $0x38] sm:$0xf]
        %v1704 = vld [vmem:[#allocation11 + $0x3c] sm:$0xf]
        %v1705 = vld [vmem:[%s7] sm:$0x1]
        %v1707 = vlaneseq
        %v1708 = vshrl.u32 %v1707, 7
        %v1709 = vsub.s32 0, %v1708
        %v1710 = vrot.slane %v1705, %v1709
        %v1728 = vunpack.c.l.b16 %v1689
        %v1729 = vunpack.c.l.b16 %v1690
        %v1730 = vunpack.c.l.b16 %v1691
        %v1731 = vunpack.c.l.b16 %v1692
        %v1732 = vunpack.c.l.b16 %v1693
        %v1733 = vunpack.c.l.b16 %v1694
        %v1734 = vunpack.c.l.b16 %v1695
        %v1735 = vunpack.c.l.b16 %v1696
        %v1736 = vunpack.c.l.b16 %v1697
        %v1737 = vunpack.c.l.b16 %v1698
        %v1738 = vunpack.c.l.b16 %v1699
        %v1739 = vunpack.c.l.b16 %v1700
        %v1740 = vunpack.c.l.b16 %v1701
        %v1741 = vunpack.c.l.b16 %v1702
        %v1742 = vunpack.c.l.b16 %v1703
        %v1743 = vunpack.c.l.b16 %v1704
        %v1744 = vpack.c.b16 %v1729, %v1728
        %v1745 = vpack.c.b16 %v1731, %v1730
        %v1746 = vpack.c.b16 %v1733, %v1732
        %v1747 = vpack.c.b16 %v1735, %v1734
        %v1748 = vpack.c.b16 %v1737, %v1736
        %v1749 = vpack.c.b16 %v1739, %v1738
        %v1750 = vpack.c.b16 %v1741, %v1740
        %v1751 = vpack.c.b16 %v1743, %v1742
        %1760 = vmatprep.subr.bf16.mxu0 0
        %1761 = vmatpush1.bf16.msra.mxu0 %v1744
        %1762 = vmatprep.subr.bf16.mxu0 0
        %1763 = vmatpush1.bf16.msra.mxu0 %v1745
        %1764 = vmatprep.subr.bf16.mxu0 0
        %1765 = vmatpush1.bf16.msra.mxu0 %v1746
        %1766 = vmatprep.subr.bf16.mxu0 0
        %1767 = vmatpush1.bf16.msra.mxu0 %v1747
        %1768 = vmatprep.subr.bf16.mxu0 0
        %1769 = vmatpush1.bf16.msra.mxu0 %v1748
        %1770 = vmatprep.subr.bf16.mxu0 0
        %1771 = vmatpush1.bf16.msra.mxu0 %v1749
        %1772 = vmatprep.subr.bf16.mxu0 0
        %1773 = vmatpush1.bf16.msra.mxu0 %v1750
        %1774 = vmatprep.subr.bf16.mxu0 0
        %1775 = vmatpush1.bf16.msra.mxu0 %v1751
        %1776 = vmatprep.subr.bf16.mxu0 0
        %1777 = vmatpush1.bf16.msra.mxu0 0
        %1778 = vmatprep.subr.bf16.mxu0 0
        %1779 = vmatpush1.bf16.msra.mxu0 0
        %1780 = vmatprep.subr.bf16.mxu0 0
        %1781 = vmatpush1.bf16.msra.mxu0 0
        %1782 = vmatprep.subr.bf16.mxu0 0
        %1783 = vmatpush1.bf16.msra.mxu0 0
        %1784 = vmatprep.subr.bf16.mxu0 0
        %1785 = vmatpush1.bf16.msra.mxu0 0
        %1786 = vmatprep.subr.bf16.mxu0 0
        %1787 = vmatpush1.bf16.msra.mxu0 0
        %1788 = vmatprep.subr.bf16.mxu0 0
        %1789 = vmatpush1.bf16.msra.mxu0 0
        %1790 = vmatprep.subr.bf16.mxu0 0
        %1791 = vmatpush1.bf16.msra.mxu0 0
        %1792 = vmatprep.mubr.bf16.mxu0 0
        %1793 = vmatmul.mubr.bf16.gmra.mrb[0].mxu0 %v1681
        %v1794 = vpop.f32.mrb[0].mxu0
        %v1795 = vadd.f32 %v1710, %v1794
        %v1796 = vpop.f32.mrb[0].mxu0
        %v1797 = vpop.f32.mrb[0].mxu0
        %v1798 = vadd.f32 %v1710, %v1797
        %v1799 = vpop.f32.mrb[0].mxu0
        %1800 = vmatprep.mubr.bf16.mxu0 0
        %1801 = vmatmul.mubr.bf16.gmra.mrb[0].mxu0 %v1682
        %v1802 = vpop.f32.mrb[0].mxu0
        %v1803 = vadd.f32 %v1710, %v1802
        %v1804 = vpop.f32.mrb[0].mxu0
        %v1805 = vpop.f32.mrb[0].mxu0
        %v1806 = vadd.f32 %v1710, %v1805
        %v1807 = vpop.f32.mrb[0].mxu0
        %1808 = vmatprep.mubr.bf16.mxu0 0
        %1809 = vmatmul.mubr.bf16.gmra.mrb[0].mxu0 %v1683
        %v1810 = vpop.f32.mrb[0].mxu0
        %v1811 = vadd.f32 %v1710, %v1810
        %v1812 = vpop.f32.mrb[0].mxu0
        %v1813 = vpop.f32.mrb[0].mxu0
        %v1814 = vadd.f32 %v1710, %v1813
        %v1815 = vpop.f32.mrb[0].mxu0
        %1816 = vmatprep.mubr.bf16.mxu0 0
        %1817 = vmatmul.mubr.bf16.gmra.mrb[0].mxu0 %v1684
        %v1818 = vpop.f32.mrb[0].mxu0
        %v1819 = vadd.f32 %v1710, %v1818
        %v1820 = vpop.f32.mrb[0].mxu0
        %v1821 = vpop.f32.mrb[0].mxu0
        %v1822 = vadd.f32 %v1710, %v1821
        %v1823 = vpop.f32.mrb[0].mxu0
        %1824 = vmatprep.mubr.bf16.mxu0 0
        %1825 = vmatmul.mubr.bf16.gmra.mrb[0].mxu0 %v1685
        %v1826 = vpop.f32.mrb[0].mxu0
        %v1827 = vadd.f32 %v1710, %v1826
        %v1828 = vpop.f32.mrb[0].mxu0
        %v1829 = vpop.f32.mrb[0].mxu0
        %v1830 = vadd.f32 %v1710, %v1829
        %v1831 = vpop.f32.mrb[0].mxu0
        %1832 = vmatprep.mubr.bf16.mxu0 0
        %1833 = vmatmul.mubr.bf16.gmra.mrb[0].mxu0 %v1686
        %v1834 = vpop.f32.mrb[0].mxu0
        %v1835 = vadd.f32 %v1710, %v1834
        %v1836 = vpop.f32.mrb[0].mxu0
        %v1837 = vpop.f32.mrb[0].mxu0
        %v1838 = vadd.f32 %v1710, %v1837
        %v1839 = vpop.f32.mrb[0].mxu0
        %1840 = vmatprep.mubr.bf16.mxu0 0
        %1841 = vmatmul.mubr.bf16.gmra.mrb[0].mxu0 %v1687
        %v1842 = vpop.f32.mrb[0].mxu0
        %v1843 = vadd.f32 %v1710, %v1842
        %v1844 = vpop.f32.mrb[0].mxu0
        %v1845 = vpop.f32.mrb[0].mxu0
        %v1846 = vadd.f32 %v1710, %v1845
        %v1847 = vpop.f32.mrb[0].mxu0
        %1848 = vmatprep.mubr.bf16.mxu0 0
        %1849 = vmatmul.mubr.bf16.gmra.mrb[0].mxu0 %v1688
        %v1850 = vpop.f32.mrb[0].mxu0
        %v1851 = vadd.f32 %v1710, %v1850
        %v1852 = vpop.f32.mrb[0].mxu0
        %v1853 = vpop.f32.mrb[0].mxu0
        %v1854 = vadd.f32 %v1710, %v1853
        %v1855 = vpop.f32.mrb[0].mxu0
        %1856 = vdwg.mxu0
        %1857 = vst [vmem:[%s421] sm:$0xff] %v1795
        %1858 = vst [vmem:[%s421 + $0x8] sm:$0xff] %v1798
        %1859 = vst [vmem:[%s421 + $0x10] sm:$0xff] %v1803
        %1860 = vst [vmem:[%s421 + $0x18] sm:$0xff] %v1806
        %1861 = vst [vmem:[%s421 + $0x20] sm:$0xff] %v1811
        %1862 = vst [vmem:[%s421 + $0x28] sm:$0xff] %v1814
        %1863 = vst [vmem:[%s421 + $0x30] sm:$0xff] %v1819
        %1864 = vst [vmem:[%s421 + $0x38] sm:$0xff] %v1822
        %1865 = vst [vmem:[%s421 + $0x40] sm:$0xff] %v1827
        %1866 = vst [vmem:[%s421 + $0x48] sm:$0xff] %v1830
        %1867 = vst [vmem:[%s421 + $0x50] sm:$0xff] %v1835
        %1868 = vst [vmem:[%s421 + $0x58] sm:$0xff] %v1838
        %1869 = vst [vmem:[%s421 + $0x60] sm:$0xff] %v1843
        %1870 = vst [vmem:[%s421 + $0x68] sm:$0xff] %v1846
        %1871 = vst [vmem:[%s421 + $0x70] sm:$0xff] %v1851
        %1872 = vst [vmem:[%s421 + $0x78] sm:$0xff] %v1854
        %s1873 = sand.u32 %s216, 1
        %s1874 = scalar_lea.sflag [#allocation4], %s1873
        %s1875 = sand.u32 %s216, 1
        %s1876 = smul.addr %s1875, 128
        %s1877 = scalar_lea.vmem [#allocation13], %s1876
        // Predicated region
        $region77: #{custom_gnn_forward.1} parent=51 // pred_check
          %p1878 = pneg %p226
        $region78: #{custom_gnn_forward.1} parent=51 // pred_check_branch
          %1880 = sbr.rel (%p1878) target = $region80
        $region79: #{custom_gnn_forward.1} parent=51 // pred_region
          %s1881 = smul.u32 16, %s30
          %s1883 = ssub.s32 2048, 2048
          %1884 = vsyncadd %s1874, %s1883
          %s1885 = smul.addr %s1881, 128
          %s1886 = scalar_lea.hbm %s8, %s1885
          %s1887 = sshll.u32 %s1877, 4
          %s1888 = int_to_ptr.vmem [resolvable:$true] %s1887
          %1893 = dma.vmem_to_hbm [thread:$0]  %s1888, 2048, %s1886, %s1874, 128, 128, 8
        $region80: #{custom_gnn_forward.1} parent=51 // pred_fallthru
          _
      $region52: #{custom_gnn_forward.1} parent=5 // pred_fallthru
        _
      %p1894 = scmp.le.s32.totalorder 2, %s25
      // Predicated region
      $region81: #{custom_gnn_forward.1} parent=5 // pred_check
        %p1895 = pneg %p1894
      $region82: #{custom_gnn_forward.1} parent=5 // pred_check_branch
        %1897 = sbr.rel (%p1895) target = $region84
      $region83: #{custom_gnn_forward.1} parent=5 // pred_region
        %s1898 = ssub.s32 %s25, 2
        // Predicated region
        $region85: #{custom_gnn_forward.1} parent=83 // pred_check
          %p1899 = pneg %p232
        $region86: #{custom_gnn_forward.1} parent=83 // pred_check_branch
          %1901 = sbr.rel (%p1899) target = $region88
        $region87: #{custom_gnn_forward.1} parent=83 // pred_region
          %s1902 = sand.u32 %s217, 1
          %s1903 = scalar_lea.sflag [#allocation4], %s1902
          %s1904 = sand.u32 %s217, 1
          %s1905 = smul.addr %s1904, 128
          %s1906 = scalar_lea.vmem [#allocation13], %s1905
          %1907 = dma.done %s1903, 2048
        $region88: #{custom_gnn_forward.1} parent=83 // pred_fallthru
          _
      $region84: #{custom_gnn_forward.1} parent=5 // pred_fallthru
        _
    $region6: #{custom_gnn_forward.1} parent=1 // loop_footer
      %s29 = sadd.s32 1, %s25
    $region7: #{custom_gnn_forward.1} parent=1 // loop_footer_branch
      %24 = sbr.rel target = $region3
    $region8: #{custom_gnn_forward.1} parent=1 // loop_exit
      _
    %1908 = vsyncpa [#allocation3], 1
    %s1909 = scalar_lea.sflag [#allocation3], 1
    %1910 = vsyncpa %s1909, 1
    %1911 = vsyncpa [#allocation6], 1
    %s1912 = scalar_lea.sflag [#allocation6], 1
    %1913 = vsyncpa %s1912, 1
    %1914 = vsyncpa [#allocation9], 1
    %1915 = vsyncpa [#allocation12], 1
    %1916 = vsyncpa [#allocation4], 1
    %s1917 = scalar_lea.sflag [#allocation4], 1
    %1918 = vsyncpa %s1917, 1

</llo_original>
